<compile_context>
chip_gen: v7x
topology: tpu7x:2x2x1
jax: 0.10.0
libtpu: 0.0.40
codegen_flags: <defaults>
</compile_context>

<pallas_src>
import functools

import jax
import jax.numpy as jnp
from jax import lax
from jax.experimental import pallas as pl
from jax.experimental.pallas import tpu as pltpu

_NEG_BIG = -1e30   # finite "minus infinity" for masked softmax
_LANE = 128


def _round_up(x, m):
    return (x + m - 1) // m * m


def _pick_tile(n_pad, target):
    """Largest power-of-two tile <= target that divides n_pad (n_pad % 128 == 0)."""
    cand = target
    while cand > 128:
        if cand <= n_pad and n_pad % cand == 0:
            return cand
        cand //= 2
    return min(128, n_pad)


# ---------------------------------------------------------------------------
# Dense layers (proj / cls): row-block grid, lane-dense padded output.
# ---------------------------------------------------------------------------
def _linear_kernel(x_ref, w_ref, b_ref, o_ref, *, relu):
    y = jnp.dot(x_ref[...], w_ref[...], preferred_element_type=jnp.float32)
    y = y + b_ref[...]
    if relu:
        y = jnp.maximum(y, 0.0)
    o_ref[...] = y


def _linear(x, w, b, *, relu, tq):
    n_pad, f_pad = x.shape
    d_pad = w.shape[1]
    return pl.pallas_call(
        functools.partial(_linear_kernel, relu=relu),
        grid=(n_pad // tq,),
        in_specs=[
            pl.BlockSpec((tq, f_pad), lambda i: (i, 0)),
            pl.BlockSpec((f_pad, d_pad), lambda i: (0, 0)),
            pl.BlockSpec((1, d_pad), lambda i: (0, 0)),
        ],
        out_specs=pl.BlockSpec((tq, d_pad), lambda i: (i, 0)),
        out_shape=jax.ShapeDtypeStruct((n_pad, d_pad), jnp.float32),
        compiler_params=pltpu.CompilerParams(dimension_semantics=("parallel",)),
    )(x, w, b)


# ---------------------------------------------------------------------------
# One AGNNConv layer: flash-style online softmax over streamed src blocks.
# ---------------------------------------------------------------------------
def _agnn_conv_kernel(beta_ref, hq_ref, hk_ref, adj_ref, o_ref,
                      m_sc, l_sc, acc_sc):
    k = pl.program_id(1)

    @pl.when(k == 0)
    def _():
        m_sc[...] = jnp.full_like(m_sc, _NEG_BIG)
        l_sc[...] = jnp.zeros_like(l_sc)
        acc_sc[...] = jnp.zeros_like(acc_sc)

    beta = beta_ref[0]
    hq = hq_ref[...]                                   # (tq, D) dst features
    hk = hk_ref[...]                                   # (tk, D) src features

    # Row-wise L2 normalize, matching F.normalize(p=2, dim=-1, eps=1e-12):
    # rsqrt(max(|h|^2, eps^2)) == 1 / max(|h|, eps).  rsqrt -> EUP slot.
    hq_n = hq * lax.rsqrt(jnp.maximum(jnp.sum(hq * hq, -1, keepdims=True), 1e-24))
    hk_n = hk * lax.rsqrt(jnp.maximum(jnp.sum(hk * hk, -1, keepdims=True), 1e-24))

    # Cosine * beta: beta folded into the (tq, D) operand (no N^2 scale).
    # bf16 operands, f32 accumulation (MXU-native precision).
    s = lax.dot_general(
        (hq_n * beta).astype(jnp.bfloat16), hk_n.astype(jnp.bfloat16),
        (((1,), (1,)), ((), ())), preferred_element_type=jnp.float32)  # (tq, tk)

    # Mask non-edges, online-softmax update of running (max, denom, acc).
    s = jnp.where(adj_ref[...] != 0, s, _NEG_BIG)
    m_new = jnp.maximum(m_sc[...], jnp.max(s, axis=-1, keepdims=True))
    scale = jnp.exp(m_sc[...] - m_new)
    p = jnp.exp(s - m_new)
    l_sc[...] = scale * l_sc[...] + jnp.sum(p, axis=-1, keepdims=True)
    acc_sc[...] = scale * acc_sc[...] + jnp.dot(
        p.astype(jnp.bfloat16), hk.astype(jnp.bfloat16),
        preferred_element_type=jnp.float32)
    m_sc[...] = m_new

    @pl.when(k == pl.num_programs(1) - 1)
    def _():
        # A dst row with zero in-degree never sees a real score, so its running
        # max stays at _NEG_BIG: zero its output (DGL sums an empty message
        # set -> 0).  Normalization touches only (tq,1)/(tq,D) tensors.
        has_edge = (m_sc[...] > 0.5 * _NEG_BIG).astype(jnp.float32)
        inv_l = pl.reciprocal(jnp.maximum(l_sc[...], 1e-30), approx=True)
        o_ref[...] = acc_sc[...] * inv_l * has_edge


def _agnn_conv(h, adj_i8, beta, *, tq, tk, vmem_limit):
    n_pad, d_pad = h.shape
    grid = (n_pad // tq, n_pad // tk)
    flops = 2 * (2 * n_pad * n_pad * d_pad)              # scores + aggregate
    bytes_accessed = (n_pad * n_pad                       # adj (int8)
                      + 4 * n_pad * d_pad * (grid[0] + 1)  # h re-read per dst block
                      + 4 * n_pad * d_pad)                # output write
    return pl.pallas_call(
        _agnn_conv_kernel,
        grid=grid,
        in_specs=[
            pl.BlockSpec(memory_space=pltpu.MemorySpace.SMEM),    # beta (1,)
            pl.BlockSpec((tq, d_pad), lambda i, k: (i, 0)),       # h, dst rows
            pl.BlockSpec((tk, d_pad), lambda i, k: (k, 0)),       # h, src rows
            pl.BlockSpec((tq, tk), lambda i, k: (i, k)),          # adj int8
        ],
        out_specs=pl.BlockSpec((tq, d_pad), lambda i, k: (i, 0)),
        out_shape=jax.ShapeDtypeStruct((n_pad, d_pad), jnp.float32),
        scratch_shapes=[
            pltpu.VMEM((tq, 1), jnp.float32),       # running max
            pltpu.VMEM((tq, 1), jnp.float32),       # running denominator
            pltpu.VMEM((tq, d_pad), jnp.float32),   # running weighted sum
        ],
        compiler_params=pltpu.CompilerParams(
            dimension_semantics=("parallel", "arbitrary"),
            vmem_limit_bytes=vmem_limit),
        cost_estimate=pl.CostEstimate(
            flops=int(flops),
            transcendentals=int(n_pad * n_pad + 2 * n_pad),
            bytes_accessed=int(bytes_accessed)),
    )(beta, h, h, adj_i8)


# ---------------------------------------------------------------------------
# Full forward: proj -> n_layers x AGNNConv -> cls
# ---------------------------------------------------------------------------
def agnn_dgl_forward(features, adj, params):
    n, in_feats = features.shape
    n_hidden = params["W1"].shape[1]
    n_layers = int(params["betas"].shape[0])

    f32 = jnp.float32
    f_pad = _round_up(in_feats, _LANE)
    d_pad = _round_up(n_hidden, _LANE)
    n_pad = _round_up(n, _LANE)

    # dst block <=256, src block <=512: all double-buffered blocks + scratch
    # stay ~1-2 MiB, well inside v7x's 64 MiB physical VMEM and the 16/32 MiB
    # default scoped limits on v5e/v6e.
    tq = _pick_tile(n_pad, 256)
    tk = _pick_tile(n_pad, 512)
    live = (2 * (tq * d_pad * 4 + tk * d_pad * 4 + tq * tk + tq * d_pad * 4)
            + tq * (d_pad + 16) * 4)
    vmem_limit = int(min(max(4 * live, 8 << 20), 40 << 20))

    # Zero-pad to lane-dense shapes.  Padded rows have no edges (adj padded
    # with zeros) and padded hidden columns stay exactly zero through every
    # layer, so the sliced result is bit-identical to the unpadded math.
    x = jnp.pad(features.astype(f32), ((0, n_pad - n), (0, f_pad - in_feats)))
    adj_i8 = jnp.pad((adj != 0).astype(jnp.int8),
                     ((0, n_pad - n), (0, n_pad - n)))
    w1 = jnp.pad(params["W1"].astype(f32),
                 ((0, f_pad - in_feats), (0, d_pad - n_hidden)))
    b1 = jnp.pad(params["b1"].astype(f32), ((0, 0), (0, d_pad - n_hidden)))
    w2 = jnp.pad(params["W2"].astype(f32),
                 ((0, d_pad - n_hidden), (0, d_pad - n_hidden)))
    b2 = jnp.pad(params["b2"].astype(f32), ((0, 0), (0, d_pad - n_hidden)))

    h = _linear(x, w1, b1, relu=True, tq=tq)
    for layer in range(n_layers):           # per-layer call: serial dependency,
        beta = params["betas"][layer:layer + 1].astype(f32)
        h = _agnn_conv(h, adj_i8, beta, tq=tq, tk=tk, vmem_limit=vmem_limit)
    out = _linear(h, w2, b2, relu=False, tq=tq)
    return out[:n, :n_hidden]


# ---------------------------------------------------------------------------
# Params
# ---------------------------------------------------------------------------
def init_params(key, in_feats, n_hidden, n_layers, init_beta=1.0):
    k1, k2, k3, k4 = jax.random.split(key, 4)
    lim1 = 1.0 / jnp.sqrt(jnp.float32(in_feats))
    lim2 = 1.0 / jnp.sqrt(jnp.float32(n_hidden))
    return {
        "W1": jax.random.uniform(k1, (in_feats, n_hidden), jnp.float32, -lim1, lim1),
        "b1": jax.random.uniform(k2, (1, n_hidden), jnp.float32, -lim1, lim1),
        "W2": jax.random.uniform(k3, (n_hidden, n_hidden), jnp.float32, -lim2, lim2),
        "b2": jax.random.uniform(k4, (1, n_hidden), jnp.float32, -lim2, lim2),
        "betas": jnp.full((n_layers,), init_beta, jnp.float32),
    }


# ---------------------------------------------------------------------------
# Main
# ---------------------------------------------------------------------------
if __name__ == "__main__":
    N = 128         # number of graph nodes
    IN_FEATS = 16
    N_HIDDEN = 32
    N_LAYERS = 2

    key = jax.random.PRNGKey(0)
    k_feat, k_adj, k_param = jax.random.split(key, 3)

    features = jax.random.normal(k_feat, (N, IN_FEATS), jnp.float32)

    # Deterministic synthetic graph: ring + random sparse edges + self-loops.
    rand_adj = (jax.random.uniform(k_adj, (N, N)) < 0.05).astype(jnp.float32)
    ring = jnp.eye(N, k=1, dtype=jnp.float32) + jnp.eye(N, k=-(N - 1), dtype=jnp.float32)
    adj = jnp.clip(rand_adj + ring + jnp.eye(N, dtype=jnp.float32), 0.0, 1.0)

    params = init_params(k_param, IN_FEATS, N_HIDDEN, N_LAYERS, init_beta=1.0)

    fwd = jax.jit(agnn_dgl_forward)
    out = jax.block_until_ready(fwd(features, adj, params))
    assert out.shape == (N, N_HIDDEN)
    assert bool(jnp.all(jnp.isfinite(out)))
    print("KERNEL_OK")
</pallas_src>

<mosaic_0001>
module attributes {stable_mosaic.version = 11 : i64} {
  func.func @_linear_kernel(%arg0: i32, %arg1: memref<128x128xf32, #tpu.memory_space<vmem>>, %arg2: memref<128x128xf32, #tpu.memory_space<vmem>>, %arg3: memref<1x128xf32, #tpu.memory_space<vmem>>, %arg4: memref<128x128xf32, #tpu.memory_space<vmem>>) attributes {dimension_semantics = [#tpu.dimension_semantics<parallel>], iteration_bounds = array<i64: 1>, scalar_prefetch = 0 : i64, scratch_operands = 0 : i64, tpu.core_type = #tpu.core_type<tc>, window_params = [{transform_indices = @transform_0, window_bounds = array<i64: 128, 128>}, {pipeline_mode = #tpu.pipeline_mode<synchronous>, transform_indices = @transform_1, window_bounds = array<i64: 128, 128>}, {pipeline_mode = #tpu.pipeline_mode<synchronous>, transform_indices = @transform_2, window_bounds = array<i64: 1, 128>}, {transform_indices = @transform_3, window_bounds = array<i64: 128, 128>}]} {
    %c0 = arith.constant 0 : index
    %c0_0 = arith.constant 0 : index
    %0 = vector.load %arg1[%c0, %c0_0] : memref<128x128xf32, #tpu.memory_space<vmem>>, vector<128x128xf32>
    %c0_1 = arith.constant 0 : index
    %c0_2 = arith.constant 0 : index
    %1 = vector.load %arg2[%c0_1, %c0_2] : memref<128x128xf32, #tpu.memory_space<vmem>>, vector<128x128xf32>
    %cst = arith.constant dense<0.000000e+00> : vector<128x128xf32>
    %2 = tpu.matmul %0, %1, %cst {dimension_numbers = #tpu.dot_dimension_numbers<[1], [0], [0], [1], [0, 0, 1, 1], [], []>} : vector<128x128xf32>, vector<128x128xf32>, vector<128x128xf32> -> vector<128x128xf32>
    %c0_3 = arith.constant 0 : index
    %c0_4 = arith.constant 0 : index
    %3 = vector.load %arg3[%c0_3, %c0_4] : memref<1x128xf32, #tpu.memory_space<vmem>>, vector<1x128xf32>
    %4 = vector.broadcast %3 : vector<1x128xf32> to vector<128x128xf32>
    %5 = arith.addf %2, %4 : vector<128x128xf32>
    %cst_5 = arith.constant 0.000000e+00 : f32
    %6 = vector.broadcast %cst_5 : f32 to vector<128x128xf32>
    %7 = arith.maximumf %5, %6 : vector<128x128xf32>
    %c0_6 = arith.constant 0 : index
    %c0_7 = arith.constant 0 : index
    %8 = vector.load %arg4[%c0_6, %c0_7] : memref<128x128xf32, #tpu.memory_space<vmem>>, vector<128x128xf32>
    tpu.vector_store %arg4[%c0_6, %c0_7], %7 {strides = array<i32>} : memref<128x128xf32, #tpu.memory_space<vmem>>, vector<128x128xf32>,
    return
  }
  func.func @transform_0(%arg0: i32) -> (i32, i32) {
    %c0_i32 = arith.constant 0 : i32
    %c0_i32_0 = arith.constant 0 : i32
    return %arg0, %c0_i32 : i32, i32
  }
  func.func @transform_1(%arg0: i32) -> (i32, i32) {
    %c0_i32 = arith.constant 0 : i32
    %c0_i32_0 = arith.constant 0 : i32
    %c0_i32_1 = arith.constant 0 : i32
    return %c0_i32, %c0_i32_0 : i32, i32
  }
  func.func @transform_2(%arg0: i32) -> (i32, i32) {
    %c0_i32 = arith.constant 0 : i32
    %c0_i32_0 = arith.constant 0 : i32
    %c0_i32_1 = arith.constant 0 : i32
    return %c0_i32, %c0_i32_0 : i32, i32
  }
  func.func @transform_3(%arg0: i32) -> (i32, i32) {
    %c0_i32 = arith.constant 0 : i32
    %c0_i32_0 = arith.constant 0 : i32
    return %arg0, %c0_i32 : i32, i32
  }
}

module attributes {stable_mosaic.version = 11 : i64} {
  func.func @_agnn_conv_kernel(%arg0: i32, %arg1: i32, %arg2: memref<1xf32, #tpu.memory_space<smem>>, %arg3: memref<128x128xf32, #tpu.memory_space<vmem>>, %arg4: memref<128x128xf32, #tpu.memory_space<vmem>>, %arg5: memref<128x128xi8, #tpu.memory_space<vmem>>, %arg6: memref<128x128xf32, #tpu.memory_space<vmem>>, %arg7: memref<128x1xf32, #tpu.memory_space<vmem>>, %arg8: memref<128x1xf32, #tpu.memory_space<vmem>>, %arg9: memref<128x128xf32, #tpu.memory_space<vmem>>) attributes {dimension_semantics = [#tpu.dimension_semantics<parallel>, #tpu.dimension_semantics<arbitrary>], iteration_bounds = array<i64: 1, 1>, scalar_prefetch = 0 : i64, scratch_operands = 3 : i64, tpu.core_type = #tpu.core_type<tc>, window_params = [{transform_indices = @transform_0, window_bounds = array<i64: 1>}, {transform_indices = @transform_1, window_bounds = array<i64: 128, 128>}, {transform_indices = @transform_2, window_bounds = array<i64: 128, 128>}, {transform_indices = @transform_3, window_bounds = array<i64: 128, 128>}, {transform_indices = @transform_4, window_bounds = array<i64: 128, 128>}]} {
    %c0_i32 = arith.constant 0 : i32
    %0 = arith.cmpi eq, %arg1, %c0_i32 : i32
    %1 = arith.extui %0 : i1 to i32
    %c0_i32_0 = arith.constant 0 : i32
    %2 = arith.cmpi ne, %1, %c0_i32_0 : i32
    scf.if %2 {
      %cst_31 = arith.constant -1.000000e+30 : f32
      %60 = vector.broadcast %cst_31 : f32 to vector<128x1xf32>
      %c0_32 = arith.constant 0 : index
      %c0_33 = arith.constant 0 : index
      %61 = vector.load %arg7[%c0_32, %c0_33] : memref<128x1xf32, #tpu.memory_space<vmem>>, vector<128x1xf32>
      tpu.vector_store %arg7[%c0_32, %c0_33], %60 {strides = array<i32>} : memref<128x1xf32, #tpu.memory_space<vmem>>, vector<128x1xf32>,
      %cst_34 = arith.constant 0.000000e+00 : f32
      %62 = vector.broadcast %cst_34 : f32 to vector<128x1xf32>
      %c0_35 = arith.constant 0 : index
      %c0_36 = arith.constant 0 : index
      %63 = vector.load %arg8[%c0_35, %c0_36] : memref<128x1xf32, #tpu.memory_space<vmem>>, vector<128x1xf32>
      tpu.vector_store %arg8[%c0_35, %c0_36], %62 {strides = array<i32>} : memref<128x1xf32, #tpu.memory_space<vmem>>, vector<128x1xf32>,
      %cst_37 = arith.constant 0.000000e+00 : f32
      %64 = vector.broadcast %cst_37 : f32 to vector<128x128xf32>
      %c0_38 = arith.constant 0 : index
      %c0_39 = arith.constant 0 : index
      %65 = vector.load %arg9[%c0_38, %c0_39] : memref<128x128xf32, #tpu.memory_space<vmem>>, vector<128x128xf32>
      tpu.vector_store %arg9[%c0_38, %c0_39], %64 {strides = array<i32>} : memref<128x128xf32, #tpu.memory_space<vmem>>, vector<128x128xf32>,
    } else {
    }
    %c0 = arith.constant 0 : index
    %3 = memref.load %arg2[%c0] : memref<1xf32, #tpu.memory_space<smem>>
    %c0_1 = arith.constant 0 : index
    %c0_2 = arith.constant 0 : index
    %4 = vector.load %arg3[%c0_1, %c0_2] : memref<128x128xf32, #tpu.memory_space<vmem>>, vector<128x128xf32>
    %c0_3 = arith.constant 0 : index
    %c0_4 = arith.constant 0 : index
    %5 = vector.load %arg4[%c0_3, %c0_4] : memref<128x128xf32, #tpu.memory_space<vmem>>, vector<128x128xf32>
    %6 = arith.mulf %4, %4 : vector<128x128xf32>
    %cst = arith.constant dense<0.000000e+00> : vector<128xf32>
    %7 = vector.multi_reduction <add>, %6, %cst [1] : vector<128x128xf32> to vector<128xf32>
    %8 = vector.shape_cast %7 : vector<128xf32> to vector<128x1xf32>
    %cst_5 = arith.constant 1.000000e-24 : f32
    %9 = vector.broadcast %cst_5 : f32 to vector<128x1xf32>
    %10 = arith.maximumf %8, %9 : vector<128x1xf32>
    %11 = math.rsqrt %10 : vector<128x1xf32>
    %12 = vector.broadcast %11 : vector<128x1xf32> to vector<128x128xf32>
    %13 = arith.mulf %4, %12 : vector<128x128xf32>
    %14 = arith.mulf %5, %5 : vector<128x128xf32>
    %cst_6 = arith.constant dense<0.000000e+00> : vector<128xf32>
    %15 = vector.multi_reduction <add>, %14, %cst_6 [1] : vector<128x128xf32> to vector<128xf32>
    %16 = vector.shape_cast %15 : vector<128xf32> to vector<128x1xf32>
    %cst_7 = arith.constant 1.000000e-24 : f32
    %17 = vector.broadcast %cst_7 : f32 to vector<128x1xf32>
    %18 = arith.maximumf %16, %17 : vector<128x1xf32>
    %19 = math.rsqrt %18 : vector<128x1xf32>
    %20 = vector.broadcast %19 : vector<128x1xf32> to vector<128x128xf32>
    %21 = arith.mulf %5, %20 : vector<128x128xf32>
    %22 = vector.broadcast %3 : f32 to vector<128x128xf32>
    %23 = arith.mulf %13, %22 : vector<128x128xf32>
    %24 = arith.truncf %23 : vector<128x128xf32> to vector<128x128xbf16>
    %25 = arith.truncf %21 : vector<128x128xf32> to vector<128x128xbf16>
    %cst_8 = arith.constant dense<0.000000e+00> : vector<128x128xf32>
    %26 = tpu.matmul %24, %25, %cst_8 {dimension_numbers = #tpu.dot_dimension_numbers<[1], [1], [0], [0], [0, 0, 1, 0], [], []>} : vector<128x128xbf16>, vector<128x128xbf16>, vector<128x128xf32> -> vector<128x128xf32>
    %c0_9 = arith.constant 0 : index
    %c0_10 = arith.constant 0 : index
    %27 = vector.load %arg5[%c0_9, %c0_10] : memref<128x128xi8, #tpu.memory_space<vmem>>, vector<128x128xi8>
    %c0_i8 = arith.constant 0 : i8
    %28 = vector.broadcast %c0_i8 : i8 to vector<128x128xi8>
    %29 = arith.cmpi ne, %27, %28 : vector<128x128xi8>
    %cst_11 = arith.constant -1.000000e+30 : f32
    %30 = vector.broadcast %cst_11 : f32 to vector<128x128xf32>
    %31 = arith.select %29, %26, %30 : vector<128x128xi1>, vector<128x128xf32>
    %c0_12 = arith.constant 0 : index
    %c0_13 = arith.constant 0 : index
    %32 = vector.load %arg7[%c0_12, %c0_13] : memref<128x1xf32, #tpu.memory_space<vmem>>, vector<128x1xf32>
    %cst_14 = arith.constant dense<0xFF800000> : vector<128xf32>
    %33 = vector.multi_reduction <maximumf>, %31, %cst_14 [1] : vector<128x128xf32> to vector<128xf32>
    %34 = vector.shape_cast %33 : vector<128xf32> to vector<128x1xf32>
    %35 = arith.maximumf %32, %34 : vector<128x1xf32>
    %c0_15 = arith.constant 0 : index
    %c0_16 = arith.constant 0 : index
    %36 = vector.load %arg7[%c0_15, %c0_16] : memref<128x1xf32, #tpu.memory_space<vmem>>, vector<128x1xf32>
    %37 = arith.subf %36, %35 : vector<128x1xf32>
    %38 = math.exp %37 : vector<128x1xf32>
    %39 = vector.broadcast %35 : vector<128x1xf32> to vector<128x128xf32>
    %40 = arith.subf %31, %39 : vector<128x128xf32>
    %41 = math.exp %40 : vector<128x128xf32>
    %c0_17 = arith.constant 0 : index
    %c0_18 = arith.constant 0 : index
    %42 = vector.load %arg8[%c0_17, %c0_18] : memref<128x1xf32, #tpu.memory_space<vmem>>, vector<128x1xf32>
    %43 = arith.mulf %38, %42 : vector<128x1xf32>
    %cst_19 = arith.constant dense<0.000000e+00> : vector<128xf32>
    %44 = vector.multi_reduction <add>, %41, %cst_19 [1] : vector<128x128xf32> to vector<128xf32>
    %45 = vector.shape_cast %44 : vector<128xf32> to vector<128x1xf32>
    %46 = arith.addf %43, %45 : vector<128x1xf32>
    %c0_20 = arith.constant 0 : index
    %c0_21 = arith.constant 0 : index
    %47 = vector.load %arg8[%c0_20, %c0_21] : memref<128x1xf32, #tpu.memory_space<vmem>>, vector<128x1xf32>
    tpu.vector_store %arg8[%c0_20, %c0_21], %46 {strides = array<i32>} : memref<128x1xf32, #tpu.memory_space<vmem>>, vector<128x1xf32>,
    %c0_22 = arith.constant 0 : index
    %c0_23 = arith.constant 0 : index
    %48 = vector.load %arg9[%c0_22, %c0_23] : memref<128x128xf32, #tpu.memory_space<vmem>>, vector<128x128xf32>
    %49 = vector.broadcast %38 : vector<128x1xf32> to vector<128x128xf32>
    %50 = arith.mulf %49, %48 : vector<128x128xf32>
    %51 = arith.truncf %41 : vector<128x128xf32> to vector<128x128xbf16>
    %52 = arith.truncf %5 : vector<128x128xf32> to vector<128x128xbf16>
    %cst_24 = arith.constant dense<0.000000e+00> : vector<128x128xf32>
    %53 = tpu.matmul %51, %52, %cst_24 {dimension_numbers = #tpu.dot_dimension_numbers<[1], [0], [0], [1], [0, 0, 1, 1], [], []>} : vector<128x128xbf16>, vector<128x128xbf16>, vector<128x128xf32> -> vector<128x128xf32>
    %54 = arith.addf %50, %53 : vector<128x128xf32>
    %c0_25 = arith.constant 0 : index
    %c0_26 = arith.constant 0 : index
    %55 = vector.load %arg9[%c0_25, %c0_26] : memref<128x128xf32, #tpu.memory_space<vmem>>, vector<128x128xf32>
    tpu.vector_store %arg9[%c0_25, %c0_26], %54 {strides = array<i32>} : memref<128x128xf32, #tpu.memory_space<vmem>>, vector<128x128xf32>,
    %c0_27 = arith.constant 0 : index
    %c0_28 = arith.constant 0 : index
    %56 = vector.load %arg7[%c0_27, %c0_28] : memref<128x1xf32, #tpu.memory_space<vmem>>, vector<128x1xf32>
    tpu.vector_store %arg7[%c0_27, %c0_28], %35 {strides = array<i32>} : memref<128x1xf32, #tpu.memory_space<vmem>>, vector<128x1xf32>,
    %c0_i32_29 = arith.constant 0 : i32
    %57 = arith.cmpi eq, %arg1, %c0_i32_29 : i32
    %58 = arith.extui %57 : i1 to i32
    %c0_i32_30 = arith.constant 0 : i32
    %59 = arith.cmpi ne, %58, %c0_i32_30 : i32
    scf.if %59 {
      %c0_31 = arith.constant 0 : index
      %c0_32 = arith.constant 0 : index
      %60 = vector.load %arg7[%c0_31, %c0_32] : memref<128x1xf32, #tpu.memory_space<vmem>>, vector<128x1xf32>
      %cst_33 = arith.constant -5.000000e+29 : f32
      %61 = vector.broadcast %cst_33 : f32 to vector<128x1xf32>
      %62 = arith.cmpf ogt, %60, %61 : vector<128x1xf32>
      %63 = arith.extui %62 : vector<128x1xi1> to vector<128x1xi32>
      %64 = arith.sitofp %63 : vector<128x1xi32> to vector<128x1xf32>
      %c0_34 = arith.constant 0 : index
      %c0_35 = arith.constant 0 : index
      %65 = vector.load %arg8[%c0_34, %c0_35] : memref<128x1xf32, #tpu.memory_space<vmem>>, vector<128x1xf32>
      %cst_36 = arith.constant 1.000000e-30 : f32
      %66 = vector.broadcast %cst_36 : f32 to vector<128x1xf32>
      %67 = arith.maximumf %65, %66 : vector<128x1xf32>
      %68 = tpu.reciprocal %67 {approx = true} : vector<128x1xf32> -> vector<128x1xf32>
      %c0_37 = arith.constant 0 : index
      %c0_38 = arith.constant 0 : index
      %69 = vector.load %arg9[%c0_37, %c0_38] : memref<128x128xf32, #tpu.memory_space<vmem>>, vector<128x128xf32>
      %70 = vector.broadcast %68 : vector<128x1xf32> to vector<128x128xf32>
      %71 = arith.mulf %69, %70 : vector<128x128xf32>
      %72 = vector.broadcast %64 : vector<128x1xf32> to vector<128x128xf32>
      %73 = arith.mulf %71, %72 : vector<128x128xf32>
      %c0_39 = arith.constant 0 : index
      %c0_40 = arith.constant 0 : index
      %74 = vector.load %arg6[%c0_39, %c0_40] : memref<128x128xf32, #tpu.memory_space<vmem>>, vector<128x128xf32>
      tpu.vector_store %arg6[%c0_39, %c0_40], %73 {strides = array<i32>} : memref<128x128xf32, #tpu.memory_space<vmem>>, vector<128x128xf32>,
    } else {
    }
    return
  }
  func.func @transform_0(%arg0: i32, %arg1: i32) -> i32 {
    %c0_i32 = arith.constant 0 : i32
    %c0_i32_0 = arith.constant 0 : i32
    return %c0_i32 : i32
  }
  func.func @transform_1(%arg0: i32, %arg1: i32) -> (i32, i32) {
    %c0_i32 = arith.constant 0 : i32
    %c0_i32_0 = arith.constant 0 : i32
    return %arg0, %c0_i32 : i32, i32
  }
  func.func @transform_2(%arg0: i32, %arg1: i32) -> (i32, i32) {
    %c0_i32 = arith.constant 0 : i32
    %c0_i32_0 = arith.constant 0 : i32
    return %arg1, %c0_i32 : i32, i32
  }
  func.func @transform_3(%arg0: i32, %arg1: i32) -> (i32, i32) {
    %c0_i32 = arith.constant 0 : i32
    return %arg0, %arg1 : i32, i32
  }
  func.func @transform_4(%arg0: i32, %arg1: i32) -> (i32, i32) {
    %c0_i32 = arith.constant 0 : i32
    %c0_i32_0 = arith.constant 0 : i32
    return %arg0, %c0_i32 : i32, i32
  }
}

module attributes {stable_mosaic.version = 11 : i64} {
  func.func @_linear_kernel(%arg0: i32, %arg1: memref<128x128xf32, #tpu.memory_space<vmem>>, %arg2: memref<128x128xf32, #tpu.memory_space<vmem>>, %arg3: memref<1x128xf32, #tpu.memory_space<vmem>>, %arg4: memref<128x128xf32, #tpu.memory_space<vmem>>) attributes {dimension_semantics = [#tpu.dimension_semantics<parallel>], iteration_bounds = array<i64: 1>, scalar_prefetch = 0 : i64, scratch_operands = 0 : i64, tpu.core_type = #tpu.core_type<tc>, window_params = [{transform_indices = @transform_0, window_bounds = array<i64: 128, 128>}, {pipeline_mode = #tpu.pipeline_mode<synchronous>, transform_indices = @transform_1, window_bounds = array<i64: 128, 128>}, {pipeline_mode = #tpu.pipeline_mode<synchronous>, transform_indices = @transform_2, window_bounds = array<i64: 1, 128>}, {transform_indices = @transform_3, window_bounds = array<i64: 128, 128>}]} {
    %c0 = arith.constant 0 : index
    %c0_0 = arith.constant 0 : index
    %0 = vector.load %arg1[%c0, %c0_0] : memref<128x128xf32, #tpu.memory_space<vmem>>, vector<128x128xf32>
    %c0_1 = arith.constant 0 : index
    %c0_2 = arith.constant 0 : index
    %1 = vector.load %arg2[%c0_1, %c0_2] : memref<128x128xf32, #tpu.memory_space<vmem>>, vector<128x128xf32>
    %cst = arith.constant dense<0.000000e+00> : vector<128x128xf32>
    %2 = tpu.matmul %0, %1, %cst {dimension_numbers = #tpu.dot_dimension_numbers<[1], [0], [0], [1], [0, 0, 1, 1], [], []>} : vector<128x128xf32>, vector<128x128xf32>, vector<128x128xf32> -> vector<128x128xf32>
    %c0_3 = arith.constant 0 : index
    %c0_4 = arith.constant 0 : index
    %3 = vector.load %arg3[%c0_3, %c0_4] : memref<1x128xf32, #tpu.memory_space<vmem>>, vector<1x128xf32>
    %4 = vector.broadcast %3 : vector<1x128xf32> to vector<128x128xf32>
    %5 = arith.addf %2, %4 : vector<128x128xf32>
    %c0_5 = arith.constant 0 : index
    %c0_6 = arith.constant 0 : index
    %6 = vector.load %arg4[%c0_5, %c0_6] : memref<128x128xf32, #tpu.memory_space<vmem>>, vector<128x128xf32>
    tpu.vector_store %arg4[%c0_5, %c0_6], %5 {strides = array<i32>} : memref<128x128xf32, #tpu.memory_space<vmem>>, vector<128x128xf32>,
    return
  }
  func.func @transform_0(%arg0: i32) -> (i32, i32) {
    %c0_i32 = arith.constant 0 : i32
    %c0_i32_0 = arith.constant 0 : i32
    return %arg0, %c0_i32 : i32, i32
  }
  func.func @transform_1(%arg0: i32) -> (i32, i32) {
    %c0_i32 = arith.constant 0 : i32
    %c0_i32_0 = arith.constant 0 : i32
    %c0_i32_1 = arith.constant 0 : i32
    return %c0_i32, %c0_i32_0 : i32, i32
  }
  func.func @transform_2(%arg0: i32) -> (i32, i32) {
    %c0_i32 = arith.constant 0 : i32
    %c0_i32_0 = arith.constant 0 : i32
    %c0_i32_1 = arith.constant 0 : i32
    return %c0_i32, %c0_i32_0 : i32, i32
  }
  func.func @transform_3(%arg0: i32) -> (i32, i32) {
    %c0_i32 = arith.constant 0 : i32
    %c0_i32_0 = arith.constant 0 : i32
    return %arg0, %c0_i32 : i32, i32
  }
}

</mosaic_0001>

<llo_original>
// kernel: agnn_dgl_forward.4
$region0: #{agnn_dgl_forward.4}
  #allocation0 [shape = 'u32[]', space=smem, size = 0x4, offset = 0x4, fixed_abs, tag = 'smem constant byte address 0x4 - core index']
  #allocation1 [shape = 'u32[144,128]{1,0:T(1,128)}', space=vmem, size = 0x12000, scoped, tag = 'internal scratch']
  %s0 = inlined_call_operand.vmem [shape: f32[128,128], index: 0, kind: input, shape index: {}]
  %s1 = inlined_call_operand.vmem [shape: f32[128,128], index: 1, kind: input, shape index: {}]
  %s2 = inlined_call_operand.vmem [shape: f32[1,128], index: 2, kind: input, shape index: {}]
  %s3 = inlined_call_operand.vmem [shape: f32[128,128], index: 3, kind: output, shape index: {}]
  %s4 = sld [smem:[#allocation0]]
  $region22: #{agnn_dgl_forward.4} parent=0
    _
  %s6 = ssub.s32 1, %s4
  %s7 = scalar_select 0, %s6, %s4
  // Predicated region
  $region2: #{agnn_dgl_forward.4} parent=0 // pred_check
    _
  $region3: #{agnn_dgl_forward.4} parent=0 // pred_check_branch
    %9 = sbr.rel (0) target = $region5
  $region4: #{agnn_dgl_forward.4} parent=0 // pred_region
    _
  $region5: #{agnn_dgl_forward.4} parent=0 // pred_fallthru
    _
  // Predicated region
  $region6: #{agnn_dgl_forward.4} parent=0 // pred_check
    _
  $region7: #{agnn_dgl_forward.4} parent=0 // pred_check_branch
    %11 = sbr.rel (0) target = $region9
  $region8: #{agnn_dgl_forward.4} parent=0 // pred_region
    _
  $region9: #{agnn_dgl_forward.4} parent=0 // pred_fallthru
    _
  // Predicated region
  $region10: #{agnn_dgl_forward.4} parent=0 // pred_check
    _
  $region11: #{agnn_dgl_forward.4} parent=0 // pred_check_branch
    %13 = sbr.rel (0) target = $region13
  $region12: #{agnn_dgl_forward.4} parent=0 // pred_region
    _
  $region13: #{agnn_dgl_forward.4} parent=0 // pred_fallthru
    _
  %v14 = vld [vmem:[%s0] sm:$0xff]
  %v15 = vld [vmem:[%s0 + $0x8] sm:$0xff]
  %v16 = vld [vmem:[%s0 + $0x10] sm:$0xff]
  %v17 = vld [vmem:[%s0 + $0x18] sm:$0xff]
  %v18 = vld [vmem:[%s0 + $0x20] sm:$0xff]
  %v19 = vld [vmem:[%s0 + $0x28] sm:$0xff]
  %v20 = vld [vmem:[%s0 + $0x30] sm:$0xff]
  %v21 = vld [vmem:[%s0 + $0x38] sm:$0xff]
  %v22 = vld [vmem:[%s0 + $0x40] sm:$0xff]
  %v23 = vld [vmem:[%s0 + $0x48] sm:$0xff]
  %v24 = vld [vmem:[%s0 + $0x50] sm:$0xff]
  %v25 = vld [vmem:[%s0 + $0x58] sm:$0xff]
  %v26 = vld [vmem:[%s0 + $0x60] sm:$0xff]
  %v27 = vld [vmem:[%s0 + $0x68] sm:$0xff]
  %v28 = vld [vmem:[%s0 + $0x70] sm:$0xff]
  %v29 = vld [vmem:[%s0 + $0x78] sm:$0xff]
  %v30 = vld [vmem:[%s1] sm:$0xff]
  %v31 = vld [vmem:[%s1 + $0x8] sm:$0xff]
  %v32 = vld [vmem:[%s1 + $0x10] sm:$0xff]
  %v33 = vld [vmem:[%s1 + $0x18] sm:$0xff]
  %v34 = vld [vmem:[%s1 + $0x20] sm:$0xff]
  %v35 = vld [vmem:[%s1 + $0x28] sm:$0xff]
  %v36 = vld [vmem:[%s1 + $0x30] sm:$0xff]
  %v37 = vld [vmem:[%s1 + $0x38] sm:$0xff]
  %v38 = vld [vmem:[%s1 + $0x40] sm:$0xff]
  %v39 = vld [vmem:[%s1 + $0x48] sm:$0xff]
  %v40 = vld [vmem:[%s1 + $0x50] sm:$0xff]
  %v41 = vld [vmem:[%s1 + $0x58] sm:$0xff]
  %v42 = vld [vmem:[%s1 + $0x60] sm:$0xff]
  %v43 = vld [vmem:[%s1 + $0x68] sm:$0xff]
  %v44 = vld [vmem:[%s1 + $0x70] sm:$0xff]
  %v45 = vld [vmem:[%s1 + $0x78] sm:$0xff]
  %v46 = vld [vmem:[%s2] sm:$0x1]
  %v48 = vlaneseq
  %v49 = vshrl.u32 %v48, 7
  %v50 = vsub.s32 0, %v49
  %v51 = vrot.slane %v46, %v50
  %53 = vmatprep.subr.mxu0 0.0
  %54 = vmatpush1.msra.mxu0 %v30
  %55 = vmatprep.subr.mxu0 0.0
  %56 = vmatpush1.msra.mxu0 %v31
  %57 = vmatprep.subr.mxu0 0.0
  %58 = vmatpush1.msra.mxu0 %v32
  %59 = vmatprep.subr.mxu0 0.0
  %60 = vmatpush1.msra.mxu0 %v33
  %61 = vmatprep.subr.mxu0 0.0
  %62 = vmatpush1.msra.mxu0 %v34
  %63 = vmatprep.subr.mxu0 0.0
  %64 = vmatpush1.msra.mxu0 %v35
  %65 = vmatprep.subr.mxu0 0.0
  %66 = vmatpush1.msra.mxu0 %v36
  %67 = vmatprep.subr.mxu0 0.0
  %68 = vmatpush1.msra.mxu0 %v37
  %69 = vmatprep.subr.mxu0 0.0
  %70 = vmatpush1.msra.mxu0 %v38
  %71 = vmatprep.subr.mxu0 0.0
  %72 = vmatpush1.msra.mxu0 %v39
  %73 = vmatprep.subr.mxu0 0.0
  %74 = vmatpush1.msra.mxu0 %v40
  %75 = vmatprep.subr.mxu0 0.0
  %76 = vmatpush1.msra.mxu0 %v41
  %77 = vmatprep.subr.mxu0 0.0
  %78 = vmatpush1.msra.mxu0 %v42
  %79 = vmatprep.subr.mxu0 0.0
  %80 = vmatpush1.msra.mxu0 %v43
  %81 = vmatprep.subr.mxu0 0.0
  %82 = vmatpush1.msra.mxu0 %v44
  %83 = vmatprep.subr.mxu0 0.0
  %84 = vmatpush1.msra.mxu0 %v45
  %85 = vmatprep.subr.mxu0 0.0
  %86 = vmatpush1.msra.mxu0 0.0
  %87 = vmatprep.subr.mxu0 0.0
  %88 = vmatpush1.msra.mxu0 0.0
  %89 = vmatprep.subr.mxu0 0.0
  %90 = vmatpush1.msra.mxu0 0.0
  %91 = vmatprep.subr.mxu0 0.0
  %92 = vmatpush1.msra.mxu0 0.0
  %93 = vmatprep.subr.mxu0 0.0
  %94 = vmatpush1.msra.mxu0 0.0
  %95 = vmatprep.subr.mxu0 0.0
  %96 = vmatpush1.msra.mxu0 0.0
  %97 = vmatprep.subr.mxu0 0.0
  %98 = vmatpush1.msra.mxu0 0.0
  %99 = vmatprep.subr.mxu0 0.0
  %100 = vmatpush1.msra.mxu0 0.0
  %101 = vmatprep.subr.mxu0 0.0
  %102 = vmatpush1.msra.mxu0 0.0
  %103 = vmatprep.subr.mxu0 0.0
  %104 = vmatpush1.msra.mxu0 0.0
  %105 = vmatprep.subr.mxu0 0.0
  %106 = vmatpush1.msra.mxu0 0.0
  %107 = vmatprep.subr.mxu0 0.0
  %108 = vmatpush1.msra.mxu0 0.0
  %109 = vmatprep.subr.mxu0 0.0
  %110 = vmatpush1.msra.mxu0 0.0
  %111 = vmatprep.subr.mxu0 0.0
  %112 = vmatpush1.msra.mxu0 0.0
  %113 = vmatprep.subr.mxu0 0.0
  %114 = vmatpush1.msra.mxu0 0.0
  %115 = vmatprep.subr.mxu0 0.0
  %116 = vmatpush1.msra.mxu0 0.0
  %117 = vmatprep.mubr.f32.mxu0 0.0
  %118 = vmatmul.mubr.f32.gmra.mrb[0].mxu0 %v14
  %v119 = vpop.f32.mrb[0].mxu0
  %v120 = vadd.f32 %v51, %v119
  %v121 = vpop.f32.mrb[0].mxu0
  %122 = vmatprep.mubr.f32.mxu0 0.0
  %123 = vmatmul.mubr.f32.gmra.mrb[0].mxu0 %v15
  %v124 = vpop.f32.mrb[0].mxu0
  %v125 = vadd.f32 %v51, %v124
  %v126 = vpop.f32.mrb[0].mxu0
  %127 = vmatprep.mubr.f32.mxu0 0.0
  %128 = vmatmul.mubr.f32.gmra.mrb[0].mxu0 %v16
  %v129 = vpop.f32.mrb[0].mxu0
  %v130 = vadd.f32 %v51, %v129
  %v131 = vpop.f32.mrb[0].mxu0
  %132 = vmatprep.mubr.f32.mxu0 0.0
  %133 = vmatmul.mubr.f32.gmra.mrb[0].mxu0 %v17
  %v134 = vpop.f32.mrb[0].mxu0
  %v135 = vadd.f32 %v51, %v134
  %v136 = vpop.f32.mrb[0].mxu0
  %137 = vmatprep.mubr.f32.mxu0 0.0
  %138 = vmatmul.mubr.f32.gmra.mrb[0].mxu0 %v18
  %v139 = vpop.f32.mrb[0].mxu0
  %v140 = vadd.f32 %v51, %v139
  %v141 = vpop.f32.mrb[0].mxu0
  %142 = vmatprep.mubr.f32.mxu0 0.0
  %143 = vmatmul.mubr.f32.gmra.mrb[0].mxu0 %v19
  %v144 = vpop.f32.mrb[0].mxu0
  %v145 = vadd.f32 %v51, %v144
  %v146 = vpop.f32.mrb[0].mxu0
  %147 = vmatprep.mubr.f32.mxu0 0.0
  %148 = vmatmul.mubr.f32.gmra.mrb[0].mxu0 %v20
  %v149 = vpop.f32.mrb[0].mxu0
  %v150 = vadd.f32 %v51, %v149
  %v151 = vpop.f32.mrb[0].mxu0
  %152 = vmatprep.mubr.f32.mxu0 0.0
  %153 = vmatmul.mubr.f32.gmra.mrb[0].mxu0 %v21
  %v154 = vpop.f32.mrb[0].mxu0
  %v155 = vadd.f32 %v51, %v154
  %v156 = vpop.f32.mrb[0].mxu0
  %157 = vmatprep.mubr.f32.mxu0 0.0
  %158 = vmatmul.mubr.f32.gmra.mrb[0].mxu0 %v22
  %v159 = vpop.f32.mrb[0].mxu0
  %v160 = vadd.f32 %v51, %v159
  %v161 = vpop.f32.mrb[0].mxu0
  %162 = vmatprep.mubr.f32.mxu0 0.0
  %163 = vmatmul.mubr.f32.gmra.mrb[0].mxu0 %v23
  %v164 = vpop.f32.mrb[0].mxu0
  %v165 = vadd.f32 %v51, %v164
  %v166 = vpop.f32.mrb[0].mxu0
  %167 = vmatprep.mubr.f32.mxu0 0.0
  %168 = vmatmul.mubr.f32.gmra.mrb[0].mxu0 %v24
  %v169 = vpop.f32.mrb[0].mxu0
  %v170 = vadd.f32 %v51, %v169
  %v171 = vpop.f32.mrb[0].mxu0
  %172 = vmatprep.mubr.f32.mxu0 0.0
  %173 = vmatmul.mubr.f32.gmra.mrb[0].mxu0 %v25
  %v174 = vpop.f32.mrb[0].mxu0
  %v175 = vadd.f32 %v51, %v174
  %v176 = vpop.f32.mrb[0].mxu0
  %177 = vmatprep.mubr.f32.mxu0 0.0
  %178 = vmatmul.mubr.f32.gmra.mrb[0].mxu0 %v26
  %v179 = vpop.f32.mrb[0].mxu0
  %v180 = vadd.f32 %v51, %v179
  %v181 = vpop.f32.mrb[0].mxu0
  %182 = vmatprep.mubr.f32.mxu0 0.0
  %183 = vmatmul.mubr.f32.gmra.mrb[0].mxu0 %v27
  %v184 = vpop.f32.mrb[0].mxu0
  %v185 = vadd.f32 %v51, %v184
  %v186 = vpop.f32.mrb[0].mxu0
  %187 = vmatprep.mubr.f32.mxu0 0.0
  %188 = vmatmul.mubr.f32.gmra.mrb[0].mxu0 %v28
  %v189 = vpop.f32.mrb[0].mxu0
  %v190 = vadd.f32 %v51, %v189
  %v191 = vpop.f32.mrb[0].mxu0
  %192 = vmatprep.mubr.f32.mxu0 0.0
  %193 = vmatmul.mubr.f32.gmra.mrb[0].mxu0 %v29
  %v194 = vpop.f32.mrb[0].mxu0
  %v195 = vadd.f32 %v51, %v194
  %v196 = vpop.f32.mrb[0].mxu0
  %197 = vdwg.mxu0
  %v198 = vmax.f32 %v120, 0.0
  %v199 = vmax.f32 %v125, 0.0
  %v200 = vmax.f32 %v130, 0.0
  %v201 = vmax.f32 %v135, 0.0
  %v202 = vmax.f32 %v140, 0.0
  %v203 = vmax.f32 %v145, 0.0
  %v204 = vmax.f32 %v150, 0.0
  %v205 = vmax.f32 %v155, 0.0
  %v206 = vmax.f32 %v160, 0.0
  %v207 = vmax.f32 %v165, 0.0
  %v208 = vmax.f32 %v170, 0.0
  %v209 = vmax.f32 %v175, 0.0
  %v210 = vmax.f32 %v180, 0.0
  %v211 = vmax.f32 %v185, 0.0
  %v212 = vmax.f32 %v190, 0.0
  %v213 = vmax.f32 %v195, 0.0
  %214 = vst [vmem:[%s3] sm:$0xff] %v198
  %215 = vst [vmem:[%s3 + $0x8] sm:$0xff] %v199
  %216 = vst [vmem:[%s3 + $0x10] sm:$0xff] %v200
  %217 = vst [vmem:[%s3 + $0x18] sm:$0xff] %v201
  %218 = vst [vmem:[%s3 + $0x20] sm:$0xff] %v202
  %219 = vst [vmem:[%s3 + $0x28] sm:$0xff] %v203
  %220 = vst [vmem:[%s3 + $0x30] sm:$0xff] %v204
  %221 = vst [vmem:[%s3 + $0x38] sm:$0xff] %v205
  %222 = vst [vmem:[%s3 + $0x40] sm:$0xff] %v206
  %223 = vst [vmem:[%s3 + $0x48] sm:$0xff] %v207
  %224 = vst [vmem:[%s3 + $0x50] sm:$0xff] %v208
  %225 = vst [vmem:[%s3 + $0x58] sm:$0xff] %v209
  %226 = vst [vmem:[%s3 + $0x60] sm:$0xff] %v210
  %227 = vst [vmem:[%s3 + $0x68] sm:$0xff] %v211
  %228 = vst [vmem:[%s3 + $0x70] sm:$0xff] %v212
  %229 = vst [vmem:[%s3 + $0x78] sm:$0xff] %v213
  // Predicated region
  $region14: #{agnn_dgl_forward.4} parent=0 // pred_check
    _
  $region15: #{agnn_dgl_forward.4} parent=0 // pred_check_branch
    %231 = sbr.rel (0) target = $region17
  $region16: #{agnn_dgl_forward.4} parent=0 // pred_region
    _
  $region17: #{agnn_dgl_forward.4} parent=0 // pred_fallthru
    _
  // Predicated region
  $region18: #{agnn_dgl_forward.4} parent=0 // pred_check
    _
  $region19: #{agnn_dgl_forward.4} parent=0 // pred_check_branch
    %233 = sbr.rel (0) target = $region21
  $region20: #{agnn_dgl_forward.4} parent=0 // pred_region
    _
  $region21: #{agnn_dgl_forward.4} parent=0 // pred_fallthru
    _

// kernel: agnn_dgl_forward.7
$region0: #{agnn_dgl_forward.7}
  #allocation0 [shape = 'u32[]', space=smem, size = 0x4, offset = 0x4, fixed_abs, tag = 'smem constant byte address 0x4 - core index']
  #allocation1 [shape = 'u32[144,128]{1,0:T(1,128)}', space=vmem, size = 0x12000, scoped, tag = 'internal scratch']
  %s0 = inlined_call_operand.vmem [shape: f32[128,128], index: 0, kind: input, shape index: {}]
  %s1 = inlined_call_operand.vmem [shape: f32[128,128], index: 1, kind: input, shape index: {}]
  %s2 = inlined_call_operand.vmem [shape: f32[1,128], index: 2, kind: input, shape index: {}]
  %s3 = inlined_call_operand.vmem [shape: f32[128,128], index: 3, kind: output, shape index: {}]
  %s4 = sld [smem:[#allocation0]]
  $region22: #{agnn_dgl_forward.7} parent=0
    _
  %s6 = ssub.s32 1, %s4
  %s7 = scalar_select 0, %s6, %s4
  // Predicated region
  $region2: #{agnn_dgl_forward.7} parent=0 // pred_check
    _
  $region3: #{agnn_dgl_forward.7} parent=0 // pred_check_branch
    %9 = sbr.rel (0) target = $region5
  $region4: #{agnn_dgl_forward.7} parent=0 // pred_region
    _
  $region5: #{agnn_dgl_forward.7} parent=0 // pred_fallthru
    _
  // Predicated region
  $region6: #{agnn_dgl_forward.7} parent=0 // pred_check
    _
  $region7: #{agnn_dgl_forward.7} parent=0 // pred_check_branch
    %11 = sbr.rel (0) target = $region9
  $region8: #{agnn_dgl_forward.7} parent=0 // pred_region
    _
  $region9: #{agnn_dgl_forward.7} parent=0 // pred_fallthru
    _
  // Predicated region
  $region10: #{agnn_dgl_forward.7} parent=0 // pred_check
    _
  $region11: #{agnn_dgl_forward.7} parent=0 // pred_check_branch
    %13 = sbr.rel (0) target = $region13
  $region12: #{agnn_dgl_forward.7} parent=0 // pred_region
    _
  $region13: #{agnn_dgl_forward.7} parent=0 // pred_fallthru
    _
  %v14 = vld [vmem:[%s0] sm:$0xff]
  %v15 = vld [vmem:[%s0 + $0x8] sm:$0xff]
  %v16 = vld [vmem:[%s0 + $0x10] sm:$0xff]
  %v17 = vld [vmem:[%s0 + $0x18] sm:$0xff]
  %v18 = vld [vmem:[%s0 + $0x20] sm:$0xff]
  %v19 = vld [vmem:[%s0 + $0x28] sm:$0xff]
  %v20 = vld [vmem:[%s0 + $0x30] sm:$0xff]
  %v21 = vld [vmem:[%s0 + $0x38] sm:$0xff]
  %v22 = vld [vmem:[%s0 + $0x40] sm:$0xff]
  %v23 = vld [vmem:[%s0 + $0x48] sm:$0xff]
  %v24 = vld [vmem:[%s0 + $0x50] sm:$0xff]
  %v25 = vld [vmem:[%s0 + $0x58] sm:$0xff]
  %v26 = vld [vmem:[%s0 + $0x60] sm:$0xff]
  %v27 = vld [vmem:[%s0 + $0x68] sm:$0xff]
  %v28 = vld [vmem:[%s0 + $0x70] sm:$0xff]
  %v29 = vld [vmem:[%s0 + $0x78] sm:$0xff]
  %v30 = vld [vmem:[%s1] sm:$0xff]
  %v31 = vld [vmem:[%s1 + $0x8] sm:$0xff]
  %v32 = vld [vmem:[%s1 + $0x10] sm:$0xff]
  %v33 = vld [vmem:[%s1 + $0x18] sm:$0xff]
  %v34 = vld [vmem:[%s1 + $0x20] sm:$0xff]
  %v35 = vld [vmem:[%s1 + $0x28] sm:$0xff]
  %v36 = vld [vmem:[%s1 + $0x30] sm:$0xff]
  %v37 = vld [vmem:[%s1 + $0x38] sm:$0xff]
  %v38 = vld [vmem:[%s1 + $0x40] sm:$0xff]
  %v39 = vld [vmem:[%s1 + $0x48] sm:$0xff]
  %v40 = vld [vmem:[%s1 + $0x50] sm:$0xff]
  %v41 = vld [vmem:[%s1 + $0x58] sm:$0xff]
  %v42 = vld [vmem:[%s1 + $0x60] sm:$0xff]
  %v43 = vld [vmem:[%s1 + $0x68] sm:$0xff]
  %v44 = vld [vmem:[%s1 + $0x70] sm:$0xff]
  %v45 = vld [vmem:[%s1 + $0x78] sm:$0xff]
  %v46 = vld [vmem:[%s2] sm:$0x1]
  %v48 = vlaneseq
  %v49 = vshrl.u32 %v48, 7
  %v50 = vsub.s32 0, %v49
  %v51 = vrot.slane %v46, %v50
  %53 = vmatprep.subr.mxu0 0.0
  %54 = vmatpush1.msra.mxu0 %v30
  %55 = vmatprep.subr.mxu0 0.0
  %56 = vmatpush1.msra.mxu0 %v31
  %57 = vmatprep.subr.mxu0 0.0
  %58 = vmatpush1.msra.mxu0 %v32
  %59 = vmatprep.subr.mxu0 0.0
  %60 = vmatpush1.msra.mxu0 %v33
  %61 = vmatprep.subr.mxu0 0.0
  %62 = vmatpush1.msra.mxu0 %v34
  %63 = vmatprep.subr.mxu0 0.0
  %64 = vmatpush1.msra.mxu0 %v35
  %65 = vmatprep.subr.mxu0 0.0
  %66 = vmatpush1.msra.mxu0 %v36
  %67 = vmatprep.subr.mxu0 0.0
  %68 = vmatpush1.msra.mxu0 %v37
  %69 = vmatprep.subr.mxu0 0.0
  %70 = vmatpush1.msra.mxu0 %v38
  %71 = vmatprep.subr.mxu0 0.0
  %72 = vmatpush1.msra.mxu0 %v39
  %73 = vmatprep.subr.mxu0 0.0
  %74 = vmatpush1.msra.mxu0 %v40
  %75 = vmatprep.subr.mxu0 0.0
  %76 = vmatpush1.msra.mxu0 %v41
  %77 = vmatprep.subr.mxu0 0.0
  %78 = vmatpush1.msra.mxu0 %v42
  %79 = vmatprep.subr.mxu0 0.0
  %80 = vmatpush1.msra.mxu0 %v43
  %81 = vmatprep.subr.mxu0 0.0
  %82 = vmatpush1.msra.mxu0 %v44
  %83 = vmatprep.subr.mxu0 0.0
  %84 = vmatpush1.msra.mxu0 %v45
  %85 = vmatprep.subr.mxu0 0.0
  %86 = vmatpush1.msra.mxu0 0.0
  %87 = vmatprep.subr.mxu0 0.0
  %88 = vmatpush1.msra.mxu0 0.0
  %89 = vmatprep.subr.mxu0 0.0
  %90 = vmatpush1.msra.mxu0 0.0
  %91 = vmatprep.subr.mxu0 0.0
  %92 = vmatpush1.msra.mxu0 0.0
  %93 = vmatprep.subr.mxu0 0.0
  %94 = vmatpush1.msra.mxu0 0.0
  %95 = vmatprep.subr.mxu0 0.0
  %96 = vmatpush1.msra.mxu0 0.0
  %97 = vmatprep.subr.mxu0 0.0
  %98 = vmatpush1.msra.mxu0 0.0
  %99 = vmatprep.subr.mxu0 0.0
  %100 = vmatpush1.msra.mxu0 0.0
  %101 = vmatprep.subr.mxu0 0.0
  %102 = vmatpush1.msra.mxu0 0.0
  %103 = vmatprep.subr.mxu0 0.0
  %104 = vmatpush1.msra.mxu0 0.0
  %105 = vmatprep.subr.mxu0 0.0
  %106 = vmatpush1.msra.mxu0 0.0
  %107 = vmatprep.subr.mxu0 0.0
  %108 = vmatpush1.msra.mxu0 0.0
  %109 = vmatprep.subr.mxu0 0.0
  %110 = vmatpush1.msra.mxu0 0.0
  %111 = vmatprep.subr.mxu0 0.0
  %112 = vmatpush1.msra.mxu0 0.0
  %113 = vmatprep.subr.mxu0 0.0
  %114 = vmatpush1.msra.mxu0 0.0
  %115 = vmatprep.subr.mxu0 0.0
  %116 = vmatpush1.msra.mxu0 0.0
  %117 = vmatprep.mubr.f32.mxu0 0.0
  %118 = vmatmul.mubr.f32.gmra.mrb[0].mxu0 %v14
  %v119 = vpop.f32.mrb[0].mxu0
  %v120 = vadd.f32 %v51, %v119
  %v121 = vpop.f32.mrb[0].mxu0
  %122 = vmatprep.mubr.f32.mxu0 0.0
  %123 = vmatmul.mubr.f32.gmra.mrb[0].mxu0 %v15
  %v124 = vpop.f32.mrb[0].mxu0
  %v125 = vadd.f32 %v51, %v124
  %v126 = vpop.f32.mrb[0].mxu0
  %127 = vmatprep.mubr.f32.mxu0 0.0
  %128 = vmatmul.mubr.f32.gmra.mrb[0].mxu0 %v16
  %v129 = vpop.f32.mrb[0].mxu0
  %v130 = vadd.f32 %v51, %v129
  %v131 = vpop.f32.mrb[0].mxu0
  %132 = vmatprep.mubr.f32.mxu0 0.0
  %133 = vmatmul.mubr.f32.gmra.mrb[0].mxu0 %v17
  %v134 = vpop.f32.mrb[0].mxu0
  %v135 = vadd.f32 %v51, %v134
  %v136 = vpop.f32.mrb[0].mxu0
  %137 = vmatprep.mubr.f32.mxu0 0.0
  %138 = vmatmul.mubr.f32.gmra.mrb[0].mxu0 %v18
  %v139 = vpop.f32.mrb[0].mxu0
  %v140 = vadd.f32 %v51, %v139
  %v141 = vpop.f32.mrb[0].mxu0
  %142 = vmatprep.mubr.f32.mxu0 0.0
  %143 = vmatmul.mubr.f32.gmra.mrb[0].mxu0 %v19
  %v144 = vpop.f32.mrb[0].mxu0
  %v145 = vadd.f32 %v51, %v144
  %v146 = vpop.f32.mrb[0].mxu0
  %147 = vmatprep.mubr.f32.mxu0 0.0
  %148 = vmatmul.mubr.f32.gmra.mrb[0].mxu0 %v20
  %v149 = vpop.f32.mrb[0].mxu0
  %v150 = vadd.f32 %v51, %v149
  %v151 = vpop.f32.mrb[0].mxu0
  %152 = vmatprep.mubr.f32.mxu0 0.0
  %153 = vmatmul.mubr.f32.gmra.mrb[0].mxu0 %v21
  %v154 = vpop.f32.mrb[0].mxu0
  %v155 = vadd.f32 %v51, %v154
  %v156 = vpop.f32.mrb[0].mxu0
  %157 = vmatprep.mubr.f32.mxu0 0.0
  %158 = vmatmul.mubr.f32.gmra.mrb[0].mxu0 %v22
  %v159 = vpop.f32.mrb[0].mxu0
  %v160 = vadd.f32 %v51, %v159
  %v161 = vpop.f32.mrb[0].mxu0
  %162 = vmatprep.mubr.f32.mxu0 0.0
  %163 = vmatmul.mubr.f32.gmra.mrb[0].mxu0 %v23
  %v164 = vpop.f32.mrb[0].mxu0
  %v165 = vadd.f32 %v51, %v164
  %v166 = vpop.f32.mrb[0].mxu0
  %167 = vmatprep.mubr.f32.mxu0 0.0
  %168 = vmatmul.mubr.f32.gmra.mrb[0].mxu0 %v24
  %v169 = vpop.f32.mrb[0].mxu0
  %v170 = vadd.f32 %v51, %v169
  %v171 = vpop.f32.mrb[0].mxu0
  %172 = vmatprep.mubr.f32.mxu0 0.0
  %173 = vmatmul.mubr.f32.gmra.mrb[0].mxu0 %v25
  %v174 = vpop.f32.mrb[0].mxu0
  %v175 = vadd.f32 %v51, %v174
  %v176 = vpop.f32.mrb[0].mxu0
  %177 = vmatprep.mubr.f32.mxu0 0.0
  %178 = vmatmul.mubr.f32.gmra.mrb[0].mxu0 %v26
  %v179 = vpop.f32.mrb[0].mxu0
  %v180 = vadd.f32 %v51, %v179
  %v181 = vpop.f32.mrb[0].mxu0
  %182 = vmatprep.mubr.f32.mxu0 0.0
  %183 = vmatmul.mubr.f32.gmra.mrb[0].mxu0 %v27
  %v184 = vpop.f32.mrb[0].mxu0
  %v185 = vadd.f32 %v51, %v184
  %v186 = vpop.f32.mrb[0].mxu0
  %187 = vmatprep.mubr.f32.mxu0 0.0
  %188 = vmatmul.mubr.f32.gmra.mrb[0].mxu0 %v28
  %v189 = vpop.f32.mrb[0].mxu0
  %v190 = vadd.f32 %v51, %v189
  %v191 = vpop.f32.mrb[0].mxu0
  %192 = vmatprep.mubr.f32.mxu0 0.0
  %193 = vmatmul.mubr.f32.gmra.mrb[0].mxu0 %v29
  %v194 = vpop.f32.mrb[0].mxu0
  %v195 = vadd.f32 %v51, %v194
  %v196 = vpop.f32.mrb[0].mxu0
  %197 = vdwg.mxu0
  %198 = vst [vmem:[%s3] sm:$0xff] %v120
  %199 = vst [vmem:[%s3 + $0x8] sm:$0xff] %v125
  %200 = vst [vmem:[%s3 + $0x10] sm:$0xff] %v130
  %201 = vst [vmem:[%s3 + $0x18] sm:$0xff] %v135
  %202 = vst [vmem:[%s3 + $0x20] sm:$0xff] %v140
  %203 = vst [vmem:[%s3 + $0x28] sm:$0xff] %v145
  %204 = vst [vmem:[%s3 + $0x30] sm:$0xff] %v150
  %205 = vst [vmem:[%s3 + $0x38] sm:$0xff] %v155
  %206 = vst [vmem:[%s3 + $0x40] sm:$0xff] %v160
  %207 = vst [vmem:[%s3 + $0x48] sm:$0xff] %v165
  %208 = vst [vmem:[%s3 + $0x50] sm:$0xff] %v170
  %209 = vst [vmem:[%s3 + $0x58] sm:$0xff] %v175
  %210 = vst [vmem:[%s3 + $0x60] sm:$0xff] %v180
  %211 = vst [vmem:[%s3 + $0x68] sm:$0xff] %v185
  %212 = vst [vmem:[%s3 + $0x70] sm:$0xff] %v190
  %213 = vst [vmem:[%s3 + $0x78] sm:$0xff] %v195
  // Predicated region
  $region14: #{agnn_dgl_forward.7} parent=0 // pred_check
    _
  $region15: #{agnn_dgl_forward.7} parent=0 // pred_check_branch
    %215 = sbr.rel (0) target = $region17
  $region16: #{agnn_dgl_forward.7} parent=0 // pred_region
    _
  $region17: #{agnn_dgl_forward.7} parent=0 // pred_fallthru
    _
  // Predicated region
  $region18: #{agnn_dgl_forward.7} parent=0 // pred_check
    _
  $region19: #{agnn_dgl_forward.7} parent=0 // pred_check_branch
    %217 = sbr.rel (0) target = $region21
  $region20: #{agnn_dgl_forward.7} parent=0 // pred_region
    _
  $region21: #{agnn_dgl_forward.7} parent=0 // pred_fallthru
    _

// kernel: agnn_dgl_forward.5
$region0: #{agnn_dgl_forward.5}
  #allocation0 [shape = 'u32[]', space=smem, size = 0x4, offset = 0x4, fixed_abs, tag = 'smem constant byte address 0x4 - core index']
  #allocation1 [shape = 'u32[144,128]{1,0:T(1,128)}', space=vmem, size = 0x12000, scoped, tag = 'internal scratch']
  #allocation2 [shape = 'f32[128,1]{1,0:T(8,128)}', space=vmem, size = 0x10000, scoped, tag = 'scratch operand']
  #allocation3 [shape = 'f32[128,1]{1,0:T(8,128)}', space=vmem, size = 0x10000, scoped, tag = 'scratch operand']
  #allocation4 [shape = 'f32[128,128]{1,0:T(8,128)}', space=vmem, size = 0x10000, scoped, tag = 'scratch operand']
  #allocation5 [shape = 'f32[1]{0:T(128)S(6)}', space=smem, size = 0x200, scoped, tag = 'scoped memory for agnn_dgl_forward.5']
  %s0 = inlined_call_operand.<no memory space> [shape: f32[1], index: 0, kind: input, shape index: {}]
  %s1 = inlined_call_operand.vmem [shape: f32[128,128], index: 1, kind: input, shape index: {}, may-alias: {1,2}]
  %s2 = inlined_call_operand.vmem [shape: f32[128,128], index: 2, kind: input, shape index: {}, may-alias: {1,2}]
  %s3 = inlined_call_operand.vmem [shape: s8[128,128], index: 3, kind: input, shape index: {}]
  %s4 = inlined_call_operand.vmem [shape: f32[128,128], index: 4, kind: output, shape index: {}]
  %s5 = sld [smem:[#allocation0]]
  $region34: #{agnn_dgl_forward.5} parent=0
    _
  %s7 = ssub.s32 1, %s5
  %s8 = scalar_select 0, %s7, %s5
  %9 = sst [smem:[#allocation5]] %s0
  // Predicated region
  $region2: #{agnn_dgl_forward.5} parent=0 // pred_check
    _
  $region3: #{agnn_dgl_forward.5} parent=0 // pred_check_branch
    %11 = sbr.rel (0) target = $region5
  $region4: #{agnn_dgl_forward.5} parent=0 // pred_region
    _
  $region5: #{agnn_dgl_forward.5} parent=0 // pred_fallthru
    _
  // Predicated region
  $region6: #{agnn_dgl_forward.5} parent=0 // pred_check
    _
  $region7: #{agnn_dgl_forward.5} parent=0 // pred_check_branch
    %13 = sbr.rel (0) target = $region9
  $region8: #{agnn_dgl_forward.5} parent=0 // pred_region
    _
  $region9: #{agnn_dgl_forward.5} parent=0 // pred_fallthru
    _
  // Predicated region
  $region10: #{agnn_dgl_forward.5} parent=0 // pred_check
    _
  $region11: #{agnn_dgl_forward.5} parent=0 // pred_check_branch
    %15 = sbr.rel (0) target = $region13
  $region12: #{agnn_dgl_forward.5} parent=0 // pred_region
    _
  $region13: #{agnn_dgl_forward.5} parent=0 // pred_fallthru
    _
  // Predicated region
  $region14: #{agnn_dgl_forward.5} parent=0 // pred_check
    _
  $region15: #{agnn_dgl_forward.5} parent=0 // pred_check_branch
    %17 = sbr.rel (0) target = $region17
  $region16: #{agnn_dgl_forward.5} parent=0 // pred_region
    _
  $region17: #{agnn_dgl_forward.5} parent=0 // pred_fallthru
    _
  %p21 = scmp.eq.s32.totalorder 0, 0
  // Predicated region
  $region18: #{agnn_dgl_forward.5} parent=0 // pred_check
    %p22 = pneg %p21
  $region19: #{agnn_dgl_forward.5} parent=0 // pred_check_branch
    %24 = sbr.rel (%p22) target = $region21
  $region20: #{agnn_dgl_forward.5} parent=0 // pred_region
    %vm25 = vcmask 7168
    %26 = vst.msk [vmem:[#allocation2] sm:$0xff] %vm25, -1e+30
    %27 = vst.msk [vmem:[#allocation2 + $0x8] sm:$0xff] %vm25, -1e+30
    %28 = vst.msk [vmem:[#allocation2 + $0x10] sm:$0xff] %vm25, -1e+30
    %29 = vst.msk [vmem:[#allocation2 + $0x18] sm:$0xff] %vm25, -1e+30
    %30 = vst.msk [vmem:[#allocation2 + $0x20] sm:$0xff] %vm25, -1e+30
    %31 = vst.msk [vmem:[#allocation2 + $0x28] sm:$0xff] %vm25, -1e+30
    %32 = vst.msk [vmem:[#allocation2 + $0x30] sm:$0xff] %vm25, -1e+30
    %33 = vst.msk [vmem:[#allocation2 + $0x38] sm:$0xff] %vm25, -1e+30
    %34 = vst.msk [vmem:[#allocation2 + $0x40] sm:$0xff] %vm25, -1e+30
    %35 = vst.msk [vmem:[#allocation2 + $0x48] sm:$0xff] %vm25, -1e+30
    %36 = vst.msk [vmem:[#allocation2 + $0x50] sm:$0xff] %vm25, -1e+30
    %37 = vst.msk [vmem:[#allocation2 + $0x58] sm:$0xff] %vm25, -1e+30
    %38 = vst.msk [vmem:[#allocation2 + $0x60] sm:$0xff] %vm25, -1e+30
    %39 = vst.msk [vmem:[#allocation2 + $0x68] sm:$0xff] %vm25, -1e+30
    %40 = vst.msk [vmem:[#allocation2 + $0x70] sm:$0xff] %vm25, -1e+30
    %41 = vst.msk [vmem:[#allocation2 + $0x78] sm:$0xff] %vm25, -1e+30
    %42 = vst.msk [vmem:[#allocation3] sm:$0xff] %vm25, 0.0
    %43 = vst.msk [vmem:[#allocation3 + $0x8] sm:$0xff] %vm25, 0.0
    %44 = vst.msk [vmem:[#allocation3 + $0x10] sm:$0xff] %vm25, 0.0
    %45 = vst.msk [vmem:[#allocation3 + $0x18] sm:$0xff] %vm25, 0.0
    %46 = vst.msk [vmem:[#allocation3 + $0x20] sm:$0xff] %vm25, 0.0
    %47 = vst.msk [vmem:[#allocation3 + $0x28] sm:$0xff] %vm25, 0.0
    %48 = vst.msk [vmem:[#allocation3 + $0x30] sm:$0xff] %vm25, 0.0
    %49 = vst.msk [vmem:[#allocation3 + $0x38] sm:$0xff] %vm25, 0.0
    %50 = vst.msk [vmem:[#allocation3 + $0x40] sm:$0xff] %vm25, 0.0
    %51 = vst.msk [vmem:[#allocation3 + $0x48] sm:$0xff] %vm25, 0.0
    %52 = vst.msk [vmem:[#allocation3 + $0x50] sm:$0xff] %vm25, 0.0
    %53 = vst.msk [vmem:[#allocation3 + $0x58] sm:$0xff] %vm25, 0.0
    %54 = vst.msk [vmem:[#allocation3 + $0x60] sm:$0xff] %vm25, 0.0
    %55 = vst.msk [vmem:[#allocation3 + $0x68] sm:$0xff] %vm25, 0.0
    %56 = vst.msk [vmem:[#allocation3 + $0x70] sm:$0xff] %vm25, 0.0
    %57 = vst.msk [vmem:[#allocation3 + $0x78] sm:$0xff] %vm25, 0.0
    %58 = vst [vmem:[#allocation4] sm:$0xff] 0.0
    %59 = vst [vmem:[#allocation4 + $0x8] sm:$0xff] 0.0
    %60 = vst [vmem:[#allocation4 + $0x10] sm:$0xff] 0.0
    %61 = vst [vmem:[#allocation4 + $0x18] sm:$0xff] 0.0
    %62 = vst [vmem:[#allocation4 + $0x20] sm:$0xff] 0.0
    %63 = vst [vmem:[#allocation4 + $0x28] sm:$0xff] 0.0
    %64 = vst [vmem:[#allocation4 + $0x30] sm:$0xff] 0.0
    %65 = vst [vmem:[#allocation4 + $0x38] sm:$0xff] 0.0
    %66 = vst [vmem:[#allocation4 + $0x40] sm:$0xff] 0.0
    %67 = vst [vmem:[#allocation4 + $0x48] sm:$0xff] 0.0
    %68 = vst [vmem:[#allocation4 + $0x50] sm:$0xff] 0.0
    %69 = vst [vmem:[#allocation4 + $0x58] sm:$0xff] 0.0
    %70 = vst [vmem:[#allocation4 + $0x60] sm:$0xff] 0.0
    %71 = vst [vmem:[#allocation4 + $0x68] sm:$0xff] 0.0
    %72 = vst [vmem:[#allocation4 + $0x70] sm:$0xff] 0.0
    %73 = vst [vmem:[#allocation4 + $0x78] sm:$0xff] 0.0
  $region21: #{agnn_dgl_forward.5} parent=0 // pred_fallthru
    _
  %s74 = sld [smem:[#allocation5]]
  %v75 = vld [vmem:[%s1] sm:$0xff]
  %v76 = vld [vmem:[%s1 + $0x8] sm:$0xff]
  %v77 = vld [vmem:[%s1 + $0x10] sm:$0xff]
  %v78 = vld [vmem:[%s1 + $0x18] sm:$0xff]
  %v79 = vld [vmem:[%s1 + $0x20] sm:$0xff]
  %v80 = vld [vmem:[%s1 + $0x28] sm:$0xff]
  %v81 = vld [vmem:[%s1 + $0x30] sm:$0xff]
  %v82 = vld [vmem:[%s1 + $0x38] sm:$0xff]
  %v83 = vld [vmem:[%s1 + $0x40] sm:$0xff]
  %v84 = vld [vmem:[%s1 + $0x48] sm:$0xff]
  %v85 = vld [vmem:[%s1 + $0x50] sm:$0xff]
  %v86 = vld [vmem:[%s1 + $0x58] sm:$0xff]
  %v87 = vld [vmem:[%s1 + $0x60] sm:$0xff]
  %v88 = vld [vmem:[%s1 + $0x68] sm:$0xff]
  %v89 = vld [vmem:[%s1 + $0x70] sm:$0xff]
  %v90 = vld [vmem:[%s1 + $0x78] sm:$0xff]
  %v91 = vld [vmem:[%s2] sm:$0xff]
  %v92 = vld [vmem:[%s2 + $0x8] sm:$0xff]
  %v93 = vld [vmem:[%s2 + $0x10] sm:$0xff]
  %v94 = vld [vmem:[%s2 + $0x18] sm:$0xff]
  %v95 = vld [vmem:[%s2 + $0x20] sm:$0xff]
  %v96 = vld [vmem:[%s2 + $0x28] sm:$0xff]
  %v97 = vld [vmem:[%s2 + $0x30] sm:$0xff]
  %v98 = vld [vmem:[%s2 + $0x38] sm:$0xff]
  %v99 = vld [vmem:[%s2 + $0x40] sm:$0xff]
  %v100 = vld [vmem:[%s2 + $0x48] sm:$0xff]
  %v101 = vld [vmem:[%s2 + $0x50] sm:$0xff]
  %v102 = vld [vmem:[%s2 + $0x58] sm:$0xff]
  %v103 = vld [vmem:[%s2 + $0x60] sm:$0xff]
  %v104 = vld [vmem:[%s2 + $0x68] sm:$0xff]
  %v105 = vld [vmem:[%s2 + $0x70] sm:$0xff]
  %v106 = vld [vmem:[%s2 + $0x78] sm:$0xff]
  %v107 = vmul.f32 %v75, %v75
  %v108 = vmul.f32 %v76, %v76
  %v109 = vmul.f32 %v77, %v77
  %v110 = vmul.f32 %v78, %v78
  %v111 = vmul.f32 %v79, %v79
  %v112 = vmul.f32 %v80, %v80
  %v113 = vmul.f32 %v81, %v81
  %v114 = vmul.f32 %v82, %v82
  %v115 = vmul.f32 %v83, %v83
  %v116 = vmul.f32 %v84, %v84
  %v117 = vmul.f32 %v85, %v85
  %v118 = vmul.f32 %v86, %v86
  %v119 = vmul.f32 %v87, %v87
  %v120 = vmul.f32 %v88, %v88
  %v121 = vmul.f32 %v89, %v89
  %v122 = vmul.f32 %v90, %v90
  %123 = vadd.xlane.f32.xlu0 %v107
  %v124 = vpop.xlane.xlu0 %123
  %125 = vadd.xlane.f32.xlu0 %v108
  %v126 = vpop.xlane.xlu0 %125
  %127 = vadd.xlane.f32.xlu0 %v109
  %v128 = vpop.xlane.xlu0 %127
  %129 = vadd.xlane.f32.xlu0 %v110
  %v130 = vpop.xlane.xlu0 %129
  %131 = vadd.xlane.f32.xlu0 %v111
  %v132 = vpop.xlane.xlu0 %131
  %133 = vadd.xlane.f32.xlu0 %v112
  %v134 = vpop.xlane.xlu0 %133
  %135 = vadd.xlane.f32.xlu0 %v113
  %v136 = vpop.xlane.xlu0 %135
  %137 = vadd.xlane.f32.xlu0 %v114
  %v138 = vpop.xlane.xlu0 %137
  %139 = vadd.xlane.f32.xlu0 %v115
  %v140 = vpop.xlane.xlu0 %139
  %141 = vadd.xlane.f32.xlu0 %v116
  %v142 = vpop.xlane.xlu0 %141
  %143 = vadd.xlane.f32.xlu0 %v117
  %v144 = vpop.xlane.xlu0 %143
  %145 = vadd.xlane.f32.xlu0 %v118
  %v146 = vpop.xlane.xlu0 %145
  %147 = vadd.xlane.f32.xlu0 %v119
  %v148 = vpop.xlane.xlu0 %147
  %149 = vadd.xlane.f32.xlu0 %v120
  %v150 = vpop.xlane.xlu0 %149
  %151 = vadd.xlane.f32.xlu0 %v121
  %v152 = vpop.xlane.xlu0 %151
  %153 = vadd.xlane.f32.xlu0 %v122
  %v154 = vpop.xlane.xlu0 %153
  %v155 = vmax.f32 %v124, 1e-24
  %v156 = vmax.f32 %v126, 1e-24
  %v157 = vmax.f32 %v128, 1e-24
  %v158 = vmax.f32 %v130, 1e-24
  %v159 = vmax.f32 %v132, 1e-24
  %v160 = vmax.f32 %v134, 1e-24
  %v161 = vmax.f32 %v136, 1e-24
  %v162 = vmax.f32 %v138, 1e-24
  %v163 = vmax.f32 %v140, 1e-24
  %v164 = vmax.f32 %v142, 1e-24
  %v165 = vmax.f32 %v144, 1e-24
  %v166 = vmax.f32 %v146, 1e-24
  %v167 = vmax.f32 %v148, 1e-24
  %v168 = vmax.f32 %v150, 1e-24
  %v169 = vmax.f32 %v152, 1e-24
  %v170 = vmax.f32 %v154, 1e-24
  %v171 = vrsqrt.pop %v155
  %v172 = vrsqrt.pop %v156
  %v173 = vrsqrt.pop %v157
  %v174 = vrsqrt.pop %v158
  %v175 = vrsqrt.pop %v159
  %v176 = vrsqrt.pop %v160
  %v177 = vrsqrt.pop %v161
  %v178 = vrsqrt.pop %v162
  %v179 = vrsqrt.pop %v163
  %v180 = vrsqrt.pop %v164
  %v181 = vrsqrt.pop %v165
  %v182 = vrsqrt.pop %v166
  %v183 = vrsqrt.pop %v167
  %v184 = vrsqrt.pop %v168
  %v185 = vrsqrt.pop %v169
  %v186 = vrsqrt.pop %v170
  %v187 = vmul.f32 %v75, %v171
  %v188 = vmul.f32 %v76, %v172
  %v189 = vmul.f32 %v77, %v173
  %v190 = vmul.f32 %v78, %v174
  %v191 = vmul.f32 %v79, %v175
  %v192 = vmul.f32 %v80, %v176
  %v193 = vmul.f32 %v81, %v177
  %v194 = vmul.f32 %v82, %v178
  %v195 = vmul.f32 %v83, %v179
  %v196 = vmul.f32 %v84, %v180
  %v197 = vmul.f32 %v85, %v181
  %v198 = vmul.f32 %v86, %v182
  %v199 = vmul.f32 %v87, %v183
  %v200 = vmul.f32 %v88, %v184
  %v201 = vmul.f32 %v89, %v185
  %v202 = vmul.f32 %v90, %v186
  %v203 = vmul.f32 %v91, %v91
  %v204 = vmul.f32 %v92, %v92
  %v205 = vmul.f32 %v93, %v93
  %v206 = vmul.f32 %v94, %v94
  %v207 = vmul.f32 %v95, %v95
  %v208 = vmul.f32 %v96, %v96
  %v209 = vmul.f32 %v97, %v97
  %v210 = vmul.f32 %v98, %v98
  %v211 = vmul.f32 %v99, %v99
  %v212 = vmul.f32 %v100, %v100
  %v213 = vmul.f32 %v101, %v101
  %v214 = vmul.f32 %v102, %v102
  %v215 = vmul.f32 %v103, %v103
  %v216 = vmul.f32 %v104, %v104
  %v217 = vmul.f32 %v105, %v105
  %v218 = vmul.f32 %v106, %v106
  %219 = vadd.xlane.f32.xlu0 %v203
  %v220 = vpop.xlane.xlu0 %219
  %221 = vadd.xlane.f32.xlu0 %v204
  %v222 = vpop.xlane.xlu0 %221
  %223 = vadd.xlane.f32.xlu0 %v205
  %v224 = vpop.xlane.xlu0 %223
  %225 = vadd.xlane.f32.xlu0 %v206
  %v226 = vpop.xlane.xlu0 %225
  %227 = vadd.xlane.f32.xlu0 %v207
  %v228 = vpop.xlane.xlu0 %227
  %229 = vadd.xlane.f32.xlu0 %v208
  %v230 = vpop.xlane.xlu0 %229
  %231 = vadd.xlane.f32.xlu0 %v209
  %v232 = vpop.xlane.xlu0 %231
  %233 = vadd.xlane.f32.xlu0 %v210
  %v234 = vpop.xlane.xlu0 %233
  %235 = vadd.xlane.f32.xlu0 %v211
  %v236 = vpop.xlane.xlu0 %235
  %237 = vadd.xlane.f32.xlu0 %v212
  %v238 = vpop.xlane.xlu0 %237
  %239 = vadd.xlane.f32.xlu0 %v213
  %v240 = vpop.xlane.xlu0 %239
  %241 = vadd.xlane.f32.xlu0 %v214
  %v242 = vpop.xlane.xlu0 %241
  %243 = vadd.xlane.f32.xlu0 %v215
  %v244 = vpop.xlane.xlu0 %243
  %245 = vadd.xlane.f32.xlu0 %v216
  %v246 = vpop.xlane.xlu0 %245
  %247 = vadd.xlane.f32.xlu0 %v217
  %v248 = vpop.xlane.xlu0 %247
  %249 = vadd.xlane.f32.xlu0 %v218
  %v250 = vpop.xlane.xlu0 %249
  %v251 = vmax.f32 %v220, 1e-24
  %v252 = vmax.f32 %v222, 1e-24
  %v253 = vmax.f32 %v224, 1e-24
  %v254 = vmax.f32 %v226, 1e-24
  %v255 = vmax.f32 %v228, 1e-24
  %v256 = vmax.f32 %v230, 1e-24
  %v257 = vmax.f32 %v232, 1e-24
  %v258 = vmax.f32 %v234, 1e-24
  %v259 = vmax.f32 %v236, 1e-24
  %v260 = vmax.f32 %v238, 1e-24
  %v261 = vmax.f32 %v240, 1e-24
  %v262 = vmax.f32 %v242, 1e-24
  %v263 = vmax.f32 %v244, 1e-24
  %v264 = vmax.f32 %v246, 1e-24
  %v265 = vmax.f32 %v248, 1e-24
  %v266 = vmax.f32 %v250, 1e-24
  %v267 = vrsqrt.pop %v251
  %v268 = vrsqrt.pop %v252
  %v269 = vrsqrt.pop %v253
  %v270 = vrsqrt.pop %v254
  %v271 = vrsqrt.pop %v255
  %v272 = vrsqrt.pop %v256
  %v273 = vrsqrt.pop %v257
  %v274 = vrsqrt.pop %v258
  %v275 = vrsqrt.pop %v259
  %v276 = vrsqrt.pop %v260
  %v277 = vrsqrt.pop %v261
  %v278 = vrsqrt.pop %v262
  %v279 = vrsqrt.pop %v263
  %v280 = vrsqrt.pop %v264
  %v281 = vrsqrt.pop %v265
  %v282 = vrsqrt.pop %v266
  %v283 = vmul.f32 %v91, %v267
  %v284 = vmul.f32 %v92, %v268
  %v285 = vmul.f32 %v93, %v269
  %v286 = vmul.f32 %v94, %v270
  %v287 = vmul.f32 %v95, %v271
  %v288 = vmul.f32 %v96, %v272
  %v289 = vmul.f32 %v97, %v273
  %v290 = vmul.f32 %v98, %v274
  %v291 = vmul.f32 %v99, %v275
  %v292 = vmul.f32 %v100, %v276
  %v293 = vmul.f32 %v101, %v277
  %v294 = vmul.f32 %v102, %v278
  %v295 = vmul.f32 %v103, %v279
  %v296 = vmul.f32 %v104, %v280
  %v297 = vmul.f32 %v105, %v281
  %v298 = vmul.f32 %v106, %v282
  %v299 = vstv %s74
  %v300 = vmul.f32 %v187, %v299
  %v301 = vmul.f32 %v188, %v299
  %v302 = vmul.f32 %v189, %v299
  %v303 = vmul.f32 %v190, %v299
  %v304 = vmul.f32 %v191, %v299
  %v305 = vmul.f32 %v192, %v299
  %v306 = vmul.f32 %v193, %v299
  %v307 = vmul.f32 %v194, %v299
  %v308 = vmul.f32 %v195, %v299
  %v309 = vmul.f32 %v196, %v299
  %v310 = vmul.f32 %v197, %v299
  %v311 = vmul.f32 %v198, %v299
  %v312 = vmul.f32 %v199, %v299
  %v313 = vmul.f32 %v200, %v299
  %v314 = vmul.f32 %v201, %v299
  %v315 = vmul.f32 %v202, %v299
  %v316 = vpack.c.bf16 %v301, %v300
  %v317 = vpack.c.bf16 %v303, %v302
  %v318 = vpack.c.bf16 %v305, %v304
  %v319 = vpack.c.bf16 %v307, %v306
  %v320 = vpack.c.bf16 %v309, %v308
  %v321 = vpack.c.bf16 %v311, %v310
  %v322 = vpack.c.bf16 %v313, %v312
  %v323 = vpack.c.bf16 %v315, %v314
  %v324 = vpack.c.bf16 %v284, %v283
  %v325 = vpack.c.bf16 %v286, %v285
  %v326 = vpack.c.bf16 %v288, %v287
  %v327 = vpack.c.bf16 %v290, %v289
  %v328 = vpack.c.bf16 %v292, %v291
  %v329 = vpack.c.bf16 %v294, %v293
  %v330 = vpack.c.bf16 %v296, %v295
  %v331 = vpack.c.bf16 %v298, %v297
  %332 = vmatprep.subr.bf16.mxu0 0
  %333 = vmatpush1.bf16.xpose.msra.mxu0 %v324
  %334 = vmatprep.subr.bf16.mxu0 0
  %335 = vmatpush1.bf16.xpose.msra.mxu0 %v325
  %336 = vmatprep.subr.bf16.mxu0 0
  %337 = vmatpush1.bf16.xpose.msra.mxu0 %v326
  %338 = vmatprep.subr.bf16.mxu0 0
  %339 = vmatpush1.bf16.xpose.msra.mxu0 %v327
  %340 = vmatprep.subr.bf16.mxu0 0
  %341 = vmatpush1.bf16.xpose.msra.mxu0 %v328
  %342 = vmatprep.subr.bf16.mxu0 0
  %343 = vmatpush1.bf16.xpose.msra.mxu0 %v329
  %344 = vmatprep.subr.bf16.mxu0 0
  %345 = vmatpush1.bf16.xpose.msra.mxu0 %v330
  %346 = vmatprep.subr.bf16.mxu0 0
  %347 = vmatpush1.bf16.xpose.msra.mxu0 %v331
  %348 = vmatprep.subr.bf16.mxu0 0
  %349 = vmatpush1.bf16.xpose.msra.mxu0 0
  %350 = vmatprep.subr.bf16.mxu0 0
  %351 = vmatpush1.bf16.xpose.msra.mxu0 0
  %352 = vmatprep.subr.bf16.mxu0 0
  %353 = vmatpush1.bf16.xpose.msra.mxu0 0
  %354 = vmatprep.subr.bf16.mxu0 0
  %355 = vmatpush1.bf16.xpose.msra.mxu0 0
  %356 = vmatprep.subr.bf16.mxu0 0
  %357 = vmatpush1.bf16.xpose.msra.mxu0 0
  %358 = vmatprep.subr.bf16.mxu0 0
  %359 = vmatpush1.bf16.xpose.msra.mxu0 0
  %360 = vmatprep.subr.bf16.mxu0 0
  %361 = vmatpush1.bf16.xpose.msra.mxu0 0
  %362 = vmatprep.subr.bf16.mxu0 0
  %363 = vmatpush1.bf16.xpose.msra.mxu0 0
  %364 = vmatprep.mubr.bf16.mxu0 0
  %365 = vmatmul.mubr.bf16.gmra.mrb[0].mxu0 %v316
  %v366 = vpop.f32.mrb[0].mxu0
  %v367 = vadd.f32 0.0, %v366
  %v368 = vpop.f32.mrb[0].mxu0
  %v369 = vpop.f32.mrb[0].mxu0
  %v370 = vadd.f32 0.0, %v369
  %v371 = vpop.f32.mrb[0].mxu0
  %372 = vmatprep.mubr.bf16.mxu0 0
  %373 = vmatmul.mubr.bf16.gmra.mrb[0].mxu0 %v317
  %v374 = vpop.f32.mrb[0].mxu0
  %v375 = vadd.f32 0.0, %v374
  %v376 = vpop.f32.mrb[0].mxu0
  %v377 = vpop.f32.mrb[0].mxu0
  %v378 = vadd.f32 0.0, %v377
  %v379 = vpop.f32.mrb[0].mxu0
  %380 = vmatprep.mubr.bf16.mxu0 0
  %381 = vmatmul.mubr.bf16.gmra.mrb[0].mxu0 %v318
  %v382 = vpop.f32.mrb[0].mxu0
  %v383 = vadd.f32 0.0, %v382
  %v384 = vpop.f32.mrb[0].mxu0
  %v385 = vpop.f32.mrb[0].mxu0
  %v386 = vadd.f32 0.0, %v385
  %v387 = vpop.f32.mrb[0].mxu0
  %388 = vmatprep.mubr.bf16.mxu0 0
  %389 = vmatmul.mubr.bf16.gmra.mrb[0].mxu0 %v319
  %v390 = vpop.f32.mrb[0].mxu0
  %v391 = vadd.f32 0.0, %v390
  %v392 = vpop.f32.mrb[0].mxu0
  %v393 = vpop.f32.mrb[0].mxu0
  %v394 = vadd.f32 0.0, %v393
  %v395 = vpop.f32.mrb[0].mxu0
  %396 = vmatprep.mubr.bf16.mxu0 0
  %397 = vmatmul.mubr.bf16.gmra.mrb[0].mxu0 %v320
  %v398 = vpop.f32.mrb[0].mxu0
  %v399 = vadd.f32 0.0, %v398
  %v400 = vpop.f32.mrb[0].mxu0
  %v401 = vpop.f32.mrb[0].mxu0
  %v402 = vadd.f32 0.0, %v401
  %v403 = vpop.f32.mrb[0].mxu0
  %404 = vmatprep.mubr.bf16.mxu0 0
  %405 = vmatmul.mubr.bf16.gmra.mrb[0].mxu0 %v321
  %v406 = vpop.f32.mrb[0].mxu0
  %v407 = vadd.f32 0.0, %v406
  %v408 = vpop.f32.mrb[0].mxu0
  %v409 = vpop.f32.mrb[0].mxu0
  %v410 = vadd.f32 0.0, %v409
  %v411 = vpop.f32.mrb[0].mxu0
  %412 = vmatprep.mubr.bf16.mxu0 0
  %413 = vmatmul.mubr.bf16.gmra.mrb[0].mxu0 %v322
  %v414 = vpop.f32.mrb[0].mxu0
  %v415 = vadd.f32 0.0, %v414
  %v416 = vpop.f32.mrb[0].mxu0
  %v417 = vpop.f32.mrb[0].mxu0
  %v418 = vadd.f32 0.0, %v417
  %v419 = vpop.f32.mrb[0].mxu0
  %420 = vmatprep.mubr.bf16.mxu0 0
  %421 = vmatmul.mubr.bf16.gmra.mrb[0].mxu0 %v323
  %v422 = vpop.f32.mrb[0].mxu0
  %v423 = vadd.f32 0.0, %v422
  %v424 = vpop.f32.mrb[0].mxu0
  %v425 = vpop.f32.mrb[0].mxu0
  %v426 = vadd.f32 0.0, %v425
  %v427 = vpop.f32.mrb[0].mxu0
  %428 = vdwg.mxu0
  %v429 = vld [vmem:[%s3] sm:$0xff]
  %v430 = vld [vmem:[%s3 + $0x8] sm:$0xff]
  %v431 = vld [vmem:[%s3 + $0x10] sm:$0xff]
  %v432 = vld [vmem:[%s3 + $0x18] sm:$0xff]
  %vm433 = vnez %v429
  %vm434 = vnez %v430
  %vm435 = vnez %v431
  %vm436 = vnez %v432
  %v437 = vsel %vm433, 16843009, 0
  %v438 = vsel %vm434, 16843009, 0
  %v439 = vsel %vm435, 16843009, 0
  %v440 = vsel %vm436, 16843009, 0
  %v441 = vunpack.c.0.s8 %v437
  %v442 = vunpack.c.1.s8 %v437
  %v443 = vunpack.c.2.s8 %v437
  %v444 = vunpack.c.3.s8 %v437
  %v445 = vunpack.c.0.s8 %v438
  %v446 = vunpack.c.1.s8 %v438
  %v447 = vunpack.c.2.s8 %v438
  %v448 = vunpack.c.3.s8 %v438
  %v449 = vunpack.c.0.s8 %v439
  %v450 = vunpack.c.1.s8 %v439
  %v451 = vunpack.c.2.s8 %v439
  %v452 = vunpack.c.3.s8 %v439
  %v453 = vunpack.c.0.s8 %v440
  %v454 = vunpack.c.1.s8 %v440
  %v455 = vunpack.c.2.s8 %v440
  %v456 = vunpack.c.3.s8 %v440
  %v457 = vpack.c.b16 %v441, %v441
  %v458 = vpack.c.b8 %v457, %v457
  %v459 = vpack.c.b16 %v442, %v442
  %v460 = vpack.c.b8 %v459, %v459
  %v461 = vpack.c.b16 %v443, %v443
  %v462 = vpack.c.b8 %v461, %v461
  %v463 = vpack.c.b16 %v444, %v444
  %v464 = vpack.c.b8 %v463, %v463
  %v465 = vpack.c.b16 %v445, %v445
  %v466 = vpack.c.b8 %v465, %v465
  %v467 = vpack.c.b16 %v446, %v446
  %v468 = vpack.c.b8 %v467, %v467
  %v469 = vpack.c.b16 %v447, %v447
  %v470 = vpack.c.b8 %v469, %v469
  %v471 = vpack.c.b16 %v448, %v448
  %v472 = vpack.c.b8 %v471, %v471
  %v473 = vpack.c.b16 %v449, %v449
  %v474 = vpack.c.b8 %v473, %v473
  %v475 = vpack.c.b16 %v450, %v450
  %v476 = vpack.c.b8 %v475, %v475
  %v477 = vpack.c.b16 %v451, %v451
  %v478 = vpack.c.b8 %v477, %v477
  %v479 = vpack.c.b16 %v452, %v452
  %v480 = vpack.c.b8 %v479, %v479
  %v481 = vpack.c.b16 %v453, %v453
  %v482 = vpack.c.b8 %v481, %v481
  %v483 = vpack.c.b16 %v454, %v454
  %v484 = vpack.c.b8 %v483, %v483
  %v485 = vpack.c.b16 %v455, %v455
  %v486 = vpack.c.b8 %v485, %v485
  %v487 = vpack.c.b16 %v456, %v456
  %v488 = vpack.c.b8 %v487, %v487
  %vm489 = vnez %v458
  %vm490 = vnez %v460
  %vm491 = vnez %v462
  %vm492 = vnez %v464
  %vm493 = vnez %v466
  %vm494 = vnez %v468
  %vm495 = vnez %v470
  %vm496 = vnez %v472
  %vm497 = vnez %v474
  %vm498 = vnez %v476
  %vm499 = vnez %v478
  %vm500 = vnez %v480
  %vm501 = vnez %v482
  %vm502 = vnez %v484
  %vm503 = vnez %v486
  %vm504 = vnez %v488
  %v505 = vsel %vm489, 16843009, 0
  %v506 = vsel %vm490, 16843009, 0
  %v507 = vsel %vm491, 16843009, 0
  %v508 = vsel %vm492, 16843009, 0
  %v509 = vsel %vm493, 16843009, 0
  %v510 = vsel %vm494, 16843009, 0
  %v511 = vsel %vm495, 16843009, 0
  %v512 = vsel %vm496, 16843009, 0
  %v513 = vsel %vm497, 16843009, 0
  %v514 = vsel %vm498, 16843009, 0
  %v515 = vsel %vm499, 16843009, 0
  %v516 = vsel %vm500, 16843009, 0
  %v517 = vsel %vm501, 16843009, 0
  %v518 = vsel %vm502, 16843009, 0
  %v519 = vsel %vm503, 16843009, 0
  %v520 = vsel %vm504, 16843009, 0
  %v521 = vunpack.c.0.s8 %v505
  %v522 = vunpack.c.0.s8 %v506
  %v523 = vunpack.c.0.s8 %v507
  %v524 = vunpack.c.0.s8 %v508
  %v525 = vunpack.c.0.s8 %v509
  %v526 = vunpack.c.0.s8 %v510
  %v527 = vunpack.c.0.s8 %v511
  %v528 = vunpack.c.0.s8 %v512
  %v529 = vunpack.c.0.s8 %v513
  %v530 = vunpack.c.0.s8 %v514
  %v531 = vunpack.c.0.s8 %v515
  %v532 = vunpack.c.0.s8 %v516
  %v533 = vunpack.c.0.s8 %v517
  %v534 = vunpack.c.0.s8 %v518
  %v535 = vunpack.c.0.s8 %v519
  %v536 = vunpack.c.0.s8 %v520
  %vm537 = vcmp.ne.s32.totalorder %v521, 0
  %vm538 = vcmp.ne.s32.totalorder %v522, 0
  %vm539 = vcmp.ne.s32.totalorder %v523, 0
  %vm540 = vcmp.ne.s32.totalorder %v524, 0
  %vm541 = vcmp.ne.s32.totalorder %v525, 0
  %vm542 = vcmp.ne.s32.totalorder %v526, 0
  %vm543 = vcmp.ne.s32.totalorder %v527, 0
  %vm544 = vcmp.ne.s32.totalorder %v528, 0
  %vm545 = vcmp.ne.s32.totalorder %v529, 0
  %vm546 = vcmp.ne.s32.totalorder %v530, 0
  %vm547 = vcmp.ne.s32.totalorder %v531, 0
  %vm548 = vcmp.ne.s32.totalorder %v532, 0
  %vm549 = vcmp.ne.s32.totalorder %v533, 0
  %vm550 = vcmp.ne.s32.totalorder %v534, 0
  %vm551 = vcmp.ne.s32.totalorder %v535, 0
  %vm552 = vcmp.ne.s32.totalorder %v536, 0
  %v553 = vsel %vm537, %v367, -1e+30
  %v554 = vsel %vm538, %v370, -1e+30
  %v555 = vsel %vm539, %v375, -1e+30
  %v556 = vsel %vm540, %v378, -1e+30
  %v557 = vsel %vm541, %v383, -1e+30
  %v558 = vsel %vm542, %v386, -1e+30
  %v559 = vsel %vm543, %v391, -1e+30
  %v560 = vsel %vm544, %v394, -1e+30
  %v561 = vsel %vm545, %v399, -1e+30
  %v562 = vsel %vm546, %v402, -1e+30
  %v563 = vsel %vm547, %v407, -1e+30
  %v564 = vsel %vm548, %v410, -1e+30
  %v565 = vsel %vm549, %v415, -1e+30
  %v566 = vsel %vm550, %v418, -1e+30
  %v567 = vsel %vm551, %v423, -1e+30
  %v568 = vsel %vm552, %v426, -1e+30
  %v569 = vld [vmem:[#allocation2] sm:$0xff]
  %v570 = vld [vmem:[#allocation2 + $0x8] sm:$0xff]
  %v571 = vld [vmem:[#allocation2 + $0x10] sm:$0xff]
  %v572 = vld [vmem:[#allocation2 + $0x18] sm:$0xff]
  %v573 = vld [vmem:[#allocation2 + $0x20] sm:$0xff]
  %v574 = vld [vmem:[#allocation2 + $0x28] sm:$0xff]
  %v575 = vld [vmem:[#allocation2 + $0x30] sm:$0xff]
  %v576 = vld [vmem:[#allocation2 + $0x38] sm:$0xff]
  %v577 = vld [vmem:[#allocation2 + $0x40] sm:$0xff]
  %v578 = vld [vmem:[#allocation2 + $0x48] sm:$0xff]
  %v579 = vld [vmem:[#allocation2 + $0x50] sm:$0xff]
  %v580 = vld [vmem:[#allocation2 + $0x58] sm:$0xff]
  %v581 = vld [vmem:[#allocation2 + $0x60] sm:$0xff]
  %v582 = vld [vmem:[#allocation2 + $0x68] sm:$0xff]
  %v583 = vld [vmem:[#allocation2 + $0x70] sm:$0xff]
  %v584 = vld [vmem:[#allocation2 + $0x78] sm:$0xff]
  %585 = vmax.xlane.f32.xlu0 %v553
  %v586 = vpop.xlane.xlu0 %585
  %587 = vmax.xlane.f32.xlu0 %v554
  %v588 = vpop.xlane.xlu0 %587
  %589 = vmax.xlane.f32.xlu0 %v555
  %v590 = vpop.xlane.xlu0 %589
  %591 = vmax.xlane.f32.xlu0 %v556
  %v592 = vpop.xlane.xlu0 %591
  %593 = vmax.xlane.f32.xlu0 %v557
  %v594 = vpop.xlane.xlu0 %593
  %595 = vmax.xlane.f32.xlu0 %v558
  %v596 = vpop.xlane.xlu0 %595
  %597 = vmax.xlane.f32.xlu0 %v559
  %v598 = vpop.xlane.xlu0 %597
  %599 = vmax.xlane.f32.xlu0 %v560
  %v600 = vpop.xlane.xlu0 %599
  %601 = vmax.xlane.f32.xlu0 %v561
  %v602 = vpop.xlane.xlu0 %601
  %603 = vmax.xlane.f32.xlu0 %v562
  %v604 = vpop.xlane.xlu0 %603
  %605 = vmax.xlane.f32.xlu0 %v563
  %v606 = vpop.xlane.xlu0 %605
  %607 = vmax.xlane.f32.xlu0 %v564
  %v608 = vpop.xlane.xlu0 %607
  %609 = vmax.xlane.f32.xlu0 %v565
  %v610 = vpop.xlane.xlu0 %609
  %611 = vmax.xlane.f32.xlu0 %v566
  %v612 = vpop.xlane.xlu0 %611
  %613 = vmax.xlane.f32.xlu0 %v567
  %v614 = vpop.xlane.xlu0 %613
  %615 = vmax.xlane.f32.xlu0 %v568
  %v616 = vpop.xlane.xlu0 %615
  %v617 = vmax.f32 %v569, %v586
  %v618 = vmax.f32 %v570, %v588
  %v619 = vmax.f32 %v571, %v590
  %v620 = vmax.f32 %v572, %v592
  %v621 = vmax.f32 %v573, %v594
  %v622 = vmax.f32 %v574, %v596
  %v623 = vmax.f32 %v575, %v598
  %v624 = vmax.f32 %v576, %v600
  %v625 = vmax.f32 %v577, %v602
  %v626 = vmax.f32 %v578, %v604
  %v627 = vmax.f32 %v579, %v606
  %v628 = vmax.f32 %v580, %v608
  %v629 = vmax.f32 %v581, %v610
  %v630 = vmax.f32 %v582, %v612
  %v631 = vmax.f32 %v583, %v614
  %v632 = vmax.f32 %v584, %v616
  %v633 = vsub.f32 %v569, %v617
  %v634 = vsub.f32 %v570, %v618
  %v635 = vsub.f32 %v571, %v619
  %v636 = vsub.f32 %v572, %v620
  %v637 = vsub.f32 %v573, %v621
  %v638 = vsub.f32 %v574, %v622
  %v639 = vsub.f32 %v575, %v623
  %v640 = vsub.f32 %v576, %v624
  %v641 = vsub.f32 %v577, %v625
  %v642 = vsub.f32 %v578, %v626
  %v643 = vsub.f32 %v579, %v627
  %v644 = vsub.f32 %v580, %v628
  %v645 = vsub.f32 %v581, %v629
  %v646 = vsub.f32 %v582, %v630
  %v647 = vsub.f32 %v583, %v631
  %v648 = vsub.f32 %v584, %v632
  %v649 = vmul.f32 %v633, 1.442695
  %v650 = vpow.pop %v649
  %v651 = vmul.f32 %v634, 1.442695
  %v652 = vpow.pop %v651
  %v653 = vmul.f32 %v635, 1.442695
  %v654 = vpow.pop %v653
  %v655 = vmul.f32 %v636, 1.442695
  %v656 = vpow.pop %v655
  %v657 = vmul.f32 %v637, 1.442695
  %v658 = vpow.pop %v657
  %v659 = vmul.f32 %v638, 1.442695
  %v660 = vpow.pop %v659
  %v661 = vmul.f32 %v639, 1.442695
  %v662 = vpow.pop %v661
  %v663 = vmul.f32 %v640, 1.442695
  %v664 = vpow.pop %v663
  %v665 = vmul.f32 %v641, 1.442695
  %v666 = vpow.pop %v665
  %v667 = vmul.f32 %v642, 1.442695
  %v668 = vpow.pop %v667
  %v669 = vmul.f32 %v643, 1.442695
  %v670 = vpow.pop %v669
  %v671 = vmul.f32 %v644, 1.442695
  %v672 = vpow.pop %v671
  %v673 = vmul.f32 %v645, 1.442695
  %v674 = vpow.pop %v673
  %v675 = vmul.f32 %v646, 1.442695
  %v676 = vpow.pop %v675
  %v677 = vmul.f32 %v647, 1.442695
  %v678 = vpow.pop %v677
  %v679 = vmul.f32 %v648, 1.442695
  %v680 = vpow.pop %v679
  %682 = vset.pattern.permute.xlu0 0
  %683 = vperm.xlu0 %682, %v617
  %v684 = vpop.permute.xlu0 %683
  %687 = vset.pattern.permute.xlu0 0
  %688 = vperm.xlu0 %687, %v618
  %v689 = vpop.permute.xlu0 %688
  %692 = vset.pattern.permute.xlu0 0
  %693 = vperm.xlu0 %692, %v619
  %v694 = vpop.permute.xlu0 %693
  %697 = vset.pattern.permute.xlu0 0
  %698 = vperm.xlu0 %697, %v620
  %v699 = vpop.permute.xlu0 %698
  %702 = vset.pattern.permute.xlu0 0
  %703 = vperm.xlu0 %702, %v621
  %v704 = vpop.permute.xlu0 %703
  %707 = vset.pattern.permute.xlu0 0
  %708 = vperm.xlu0 %707, %v622
  %v709 = vpop.permute.xlu0 %708
  %712 = vset.pattern.permute.xlu0 0
  %713 = vperm.xlu0 %712, %v623
  %v714 = vpop.permute.xlu0 %713
  %717 = vset.pattern.permute.xlu0 0
  %718 = vperm.xlu0 %717, %v624
  %v719 = vpop.permute.xlu0 %718
  %722 = vset.pattern.permute.xlu0 0
  %723 = vperm.xlu0 %722, %v625
  %v724 = vpop.permute.xlu0 %723
  %727 = vset.pattern.permute.xlu0 0
  %728 = vperm.xlu0 %727, %v626
  %v729 = vpop.permute.xlu0 %728
  %732 = vset.pattern.permute.xlu0 0
  %733 = vperm.xlu0 %732, %v627
  %v734 = vpop.permute.xlu0 %733
  %737 = vset.pattern.permute.xlu0 0
  %738 = vperm.xlu0 %737, %v628
  %v739 = vpop.permute.xlu0 %738
  %742 = vset.pattern.permute.xlu0 0
  %743 = vperm.xlu0 %742, %v629
  %v744 = vpop.permute.xlu0 %743
  %747 = vset.pattern.permute.xlu0 0
  %748 = vperm.xlu0 %747, %v630
  %v749 = vpop.permute.xlu0 %748
  %752 = vset.pattern.permute.xlu0 0
  %753 = vperm.xlu0 %752, %v631
  %v754 = vpop.permute.xlu0 %753
  %757 = vset.pattern.permute.xlu0 0
  %758 = vperm.xlu0 %757, %v632
  %v759 = vpop.permute.xlu0 %758
  %v761 = vsub.f32 %v553, %v684
  %v762 = vsub.f32 %v554, %v689
  %v763 = vsub.f32 %v555, %v694
  %v764 = vsub.f32 %v556, %v699
  %v765 = vsub.f32 %v557, %v704
  %v766 = vsub.f32 %v558, %v709
  %v767 = vsub.f32 %v559, %v714
  %v768 = vsub.f32 %v560, %v719
  %v769 = vsub.f32 %v561, %v724
  %v770 = vsub.f32 %v562, %v729
  %v771 = vsub.f32 %v563, %v734
  %v772 = vsub.f32 %v564, %v739
  %v773 = vsub.f32 %v565, %v744
  %v774 = vsub.f32 %v566, %v749
  %v775 = vsub.f32 %v567, %v754
  %v776 = vsub.f32 %v568, %v759
  %v777 = vmul.f32 %v761, 1.442695
  %v778 = vpow.pop %v777
  %v779 = vmul.f32 %v762, 1.442695
  %v780 = vpow.pop %v779
  %v781 = vmul.f32 %v763, 1.442695
  %v782 = vpow.pop %v781
  %v783 = vmul.f32 %v764, 1.442695
  %v784 = vpow.pop %v783
  %v785 = vmul.f32 %v765, 1.442695
  %v786 = vpow.pop %v785
  %v787 = vmul.f32 %v766, 1.442695
  %v788 = vpow.pop %v787
  %v789 = vmul.f32 %v767, 1.442695
  %v790 = vpow.pop %v789
  %v791 = vmul.f32 %v768, 1.442695
  %v792 = vpow.pop %v791
  %v793 = vmul.f32 %v769, 1.442695
  %v794 = vpow.pop %v793
  %v795 = vmul.f32 %v770, 1.442695
  %v796 = vpow.pop %v795
  %v797 = vmul.f32 %v771, 1.442695
  %v798 = vpow.pop %v797
  %v799 = vmul.f32 %v772, 1.442695
  %v800 = vpow.pop %v799
  %v801 = vmul.f32 %v773, 1.442695
  %v802 = vpow.pop %v801
  %v803 = vmul.f32 %v774, 1.442695
  %v804 = vpow.pop %v803
  %v805 = vmul.f32 %v775, 1.442695
  %v806 = vpow.pop %v805
  %v807 = vmul.f32 %v776, 1.442695
  %v808 = vpow.pop %v807
  %v809 = vld [vmem:[#allocation3] sm:$0xff]
  %v810 = vld [vmem:[#allocation3 + $0x8] sm:$0xff]
  %v811 = vld [vmem:[#allocation3 + $0x10] sm:$0xff]
  %v812 = vld [vmem:[#allocation3 + $0x18] sm:$0xff]
  %v813 = vld [vmem:[#allocation3 + $0x20] sm:$0xff]
  %v814 = vld [vmem:[#allocation3 + $0x28] sm:$0xff]
  %v815 = vld [vmem:[#allocation3 + $0x30] sm:$0xff]
  %v816 = vld [vmem:[#allocation3 + $0x38] sm:$0xff]
  %v817 = vld [vmem:[#allocation3 + $0x40] sm:$0xff]
  %v818 = vld [vmem:[#allocation3 + $0x48] sm:$0xff]
  %v819 = vld [vmem:[#allocation3 + $0x50] sm:$0xff]
  %v820 = vld [vmem:[#allocation3 + $0x58] sm:$0xff]
  %v821 = vld [vmem:[#allocation3 + $0x60] sm:$0xff]
  %v822 = vld [vmem:[#allocation3 + $0x68] sm:$0xff]
  %v823 = vld [vmem:[#allocation3 + $0x70] sm:$0xff]
  %v824 = vld [vmem:[#allocation3 + $0x78] sm:$0xff]
  %v825 = vmul.f32 %v650, %v809
  %v826 = vmul.f32 %v652, %v810
  %v827 = vmul.f32 %v654, %v811
  %v828 = vmul.f32 %v656, %v812
  %v829 = vmul.f32 %v658, %v813
  %v830 = vmul.f32 %v660, %v814
  %v831 = vmul.f32 %v662, %v815
  %v832 = vmul.f32 %v664, %v816
  %v833 = vmul.f32 %v666, %v817
  %v834 = vmul.f32 %v668, %v818
  %v835 = vmul.f32 %v670, %v819
  %v836 = vmul.f32 %v672, %v820
  %v837 = vmul.f32 %v674, %v821
  %v838 = vmul.f32 %v676, %v822
  %v839 = vmul.f32 %v678, %v823
  %v840 = vmul.f32 %v680, %v824
  %841 = vadd.xlane.f32.xlu0 %v778
  %v842 = vpop.xlane.xlu0 %841
  %843 = vadd.xlane.f32.xlu0 %v780
  %v844 = vpop.xlane.xlu0 %843
  %845 = vadd.xlane.f32.xlu0 %v782
  %v846 = vpop.xlane.xlu0 %845
  %847 = vadd.xlane.f32.xlu0 %v784
  %v848 = vpop.xlane.xlu0 %847
  %849 = vadd.xlane.f32.xlu0 %v786
  %v850 = vpop.xlane.xlu0 %849
  %851 = vadd.xlane.f32.xlu0 %v788
  %v852 = vpop.xlane.xlu0 %851
  %853 = vadd.xlane.f32.xlu0 %v790
  %v854 = vpop.xlane.xlu0 %853
  %855 = vadd.xlane.f32.xlu0 %v792
  %v856 = vpop.xlane.xlu0 %855
  %857 = vadd.xlane.f32.xlu0 %v794
  %v858 = vpop.xlane.xlu0 %857
  %859 = vadd.xlane.f32.xlu0 %v796
  %v860 = vpop.xlane.xlu0 %859
  %861 = vadd.xlane.f32.xlu0 %v798
  %v862 = vpop.xlane.xlu0 %861
  %863 = vadd.xlane.f32.xlu0 %v800
  %v864 = vpop.xlane.xlu0 %863
  %865 = vadd.xlane.f32.xlu0 %v802
  %v866 = vpop.xlane.xlu0 %865
  %867 = vadd.xlane.f32.xlu0 %v804
  %v868 = vpop.xlane.xlu0 %867
  %869 = vadd.xlane.f32.xlu0 %v806
  %v870 = vpop.xlane.xlu0 %869
  %871 = vadd.xlane.f32.xlu0 %v808
  %v872 = vpop.xlane.xlu0 %871
  %v873 = vadd.f32 %v825, %v842
  %v874 = vadd.f32 %v826, %v844
  %v875 = vadd.f32 %v827, %v846
  %v876 = vadd.f32 %v828, %v848
  %v877 = vadd.f32 %v829, %v850
  %v878 = vadd.f32 %v830, %v852
  %v879 = vadd.f32 %v831, %v854
  %v880 = vadd.f32 %v832, %v856
  %v881 = vadd.f32 %v833, %v858
  %v882 = vadd.f32 %v834, %v860
  %v883 = vadd.f32 %v835, %v862
  %v884 = vadd.f32 %v836, %v864
  %v885 = vadd.f32 %v837, %v866
  %v886 = vadd.f32 %v838, %v868
  %v887 = vadd.f32 %v839, %v870
  %v888 = vadd.f32 %v840, %v872
  %vm889 = vcmask 7168
  %890 = vst.msk [vmem:[#allocation3] sm:$0xff] %vm889, %v873
  %891 = vst.msk [vmem:[#allocation3 + $0x8] sm:$0xff] %vm889, %v874
  %892 = vst.msk [vmem:[#allocation3 + $0x10] sm:$0xff] %vm889, %v875
  %893 = vst.msk [vmem:[#allocation3 + $0x18] sm:$0xff] %vm889, %v876
  %894 = vst.msk [vmem:[#allocation3 + $0x20] sm:$0xff] %vm889, %v877
  %895 = vst.msk [vmem:[#allocation3 + $0x28] sm:$0xff] %vm889, %v878
  %896 = vst.msk [vmem:[#allocation3 + $0x30] sm:$0xff] %vm889, %v879
  %897 = vst.msk [vmem:[#allocation3 + $0x38] sm:$0xff] %vm889, %v880
  %898 = vst.msk [vmem:[#allocation3 + $0x40] sm:$0xff] %vm889, %v881
  %899 = vst.msk [vmem:[#allocation3 + $0x48] sm:$0xff] %vm889, %v882
  %900 = vst.msk [vmem:[#allocation3 + $0x50] sm:$0xff] %vm889, %v883
  %901 = vst.msk [vmem:[#allocation3 + $0x58] sm:$0xff] %vm889, %v884
  %902 = vst.msk [vmem:[#allocation3 + $0x60] sm:$0xff] %vm889, %v885
  %903 = vst.msk [vmem:[#allocation3 + $0x68] sm:$0xff] %vm889, %v886
  %904 = vst.msk [vmem:[#allocation3 + $0x70] sm:$0xff] %vm889, %v887
  %905 = vst.msk [vmem:[#allocation3 + $0x78] sm:$0xff] %vm889, %v888
  %v906 = vld [vmem:[#allocation4] sm:$0xff]
  %v907 = vld [vmem:[#allocation4 + $0x8] sm:$0xff]
  %v908 = vld [vmem:[#allocation4 + $0x10] sm:$0xff]
  %v909 = vld [vmem:[#allocation4 + $0x18] sm:$0xff]
  %v910 = vld [vmem:[#allocation4 + $0x20] sm:$0xff]
  %v911 = vld [vmem:[#allocation4 + $0x28] sm:$0xff]
  %v912 = vld [vmem:[#allocation4 + $0x30] sm:$0xff]
  %v913 = vld [vmem:[#allocation4 + $0x38] sm:$0xff]
  %v914 = vld [vmem:[#allocation4 + $0x40] sm:$0xff]
  %v915 = vld [vmem:[#allocation4 + $0x48] sm:$0xff]
  %v916 = vld [vmem:[#allocation4 + $0x50] sm:$0xff]
  %v917 = vld [vmem:[#allocation4 + $0x58] sm:$0xff]
  %v918 = vld [vmem:[#allocation4 + $0x60] sm:$0xff]
  %v919 = vld [vmem:[#allocation4 + $0x68] sm:$0xff]
  %v920 = vld [vmem:[#allocation4 + $0x70] sm:$0xff]
  %v921 = vld [vmem:[#allocation4 + $0x78] sm:$0xff]
  %923 = vset.pattern.permute.xlu0 0
  %924 = vperm.xlu0 %923, %v650
  %v925 = vpop.permute.xlu0 %924
  %928 = vset.pattern.permute.xlu0 0
  %929 = vperm.xlu0 %928, %v652
  %v930 = vpop.permute.xlu0 %929
  %933 = vset.pattern.permute.xlu0 0
  %934 = vperm.xlu0 %933, %v654
  %v935 = vpop.permute.xlu0 %934
  %938 = vset.pattern.permute.xlu0 0
  %939 = vperm.xlu0 %938, %v656
  %v940 = vpop.permute.xlu0 %939
  %943 = vset.pattern.permute.xlu0 0
  %944 = vperm.xlu0 %943, %v658
  %v945 = vpop.permute.xlu0 %944
  %948 = vset.pattern.permute.xlu0 0
  %949 = vperm.xlu0 %948, %v660
  %v950 = vpop.permute.xlu0 %949
  %953 = vset.pattern.permute.xlu0 0
  %954 = vperm.xlu0 %953, %v662
  %v955 = vpop.permute.xlu0 %954
  %958 = vset.pattern.permute.xlu0 0
  %959 = vperm.xlu0 %958, %v664
  %v960 = vpop.permute.xlu0 %959
  %963 = vset.pattern.permute.xlu0 0
  %964 = vperm.xlu0 %963, %v666
  %v965 = vpop.permute.xlu0 %964
  %968 = vset.pattern.permute.xlu0 0
  %969 = vperm.xlu0 %968, %v668
  %v970 = vpop.permute.xlu0 %969
  %973 = vset.pattern.permute.xlu0 0
  %974 = vperm.xlu0 %973, %v670
  %v975 = vpop.permute.xlu0 %974
  %978 = vset.pattern.permute.xlu0 0
  %979 = vperm.xlu0 %978, %v672
  %v980 = vpop.permute.xlu0 %979
  %983 = vset.pattern.permute.xlu0 0
  %984 = vperm.xlu0 %983, %v674
  %v985 = vpop.permute.xlu0 %984
  %988 = vset.pattern.permute.xlu0 0
  %989 = vperm.xlu0 %988, %v676
  %v990 = vpop.permute.xlu0 %989
  %993 = vset.pattern.permute.xlu0 0
  %994 = vperm.xlu0 %993, %v678
  %v995 = vpop.permute.xlu0 %994
  %998 = vset.pattern.permute.xlu0 0
  %999 = vperm.xlu0 %998, %v680
  %v1000 = vpop.permute.xlu0 %999
  %v1002 = vmul.f32 %v925, %v906
  %v1003 = vmul.f32 %v930, %v907
  %v1004 = vmul.f32 %v935, %v908
  %v1005 = vmul.f32 %v940, %v909
  %v1006 = vmul.f32 %v945, %v910
  %v1007 = vmul.f32 %v950, %v911
  %v1008 = vmul.f32 %v955, %v912
  %v1009 = vmul.f32 %v960, %v913
  %v1010 = vmul.f32 %v965, %v914
  %v1011 = vmul.f32 %v970, %v915
  %v1012 = vmul.f32 %v975, %v916
  %v1013 = vmul.f32 %v980, %v917
  %v1014 = vmul.f32 %v985, %v918
  %v1015 = vmul.f32 %v990, %v919
  %v1016 = vmul.f32 %v995, %v920
  %v1017 = vmul.f32 %v1000, %v921
  %v1018 = vpack.c.bf16 %v780, %v778
  %v1019 = vpack.c.bf16 %v784, %v782
  %v1020 = vpack.c.bf16 %v788, %v786
  %v1021 = vpack.c.bf16 %v792, %v790
  %v1022 = vpack.c.bf16 %v796, %v794
  %v1023 = vpack.c.bf16 %v800, %v798
  %v1024 = vpack.c.bf16 %v804, %v802
  %v1025 = vpack.c.bf16 %v808, %v806
  %v1026 = vpack.c.bf16 %v92, %v91
  %v1027 = vpack.c.bf16 %v94, %v93
  %v1028 = vpack.c.bf16 %v96, %v95
  %v1029 = vpack.c.bf16 %v98, %v97
  %v1030 = vpack.c.bf16 %v100, %v99
  %v1031 = vpack.c.bf16 %v102, %v101
  %v1032 = vpack.c.bf16 %v104, %v103
  %v1033 = vpack.c.bf16 %v106, %v105
  %1034 = vmatprep.subr.bf16.mxu0 0
  %1035 = vmatpush1.bf16.msra.mxu0 %v1026
  %1036 = vmatprep.subr.bf16.mxu0 0
  %1037 = vmatpush1.bf16.msra.mxu0 %v1027
  %1038 = vmatprep.subr.bf16.mxu0 0
  %1039 = vmatpush1.bf16.msra.mxu0 %v1028
  %1040 = vmatprep.subr.bf16.mxu0 0
  %1041 = vmatpush1.bf16.msra.mxu0 %v1029
  %1042 = vmatprep.subr.bf16.mxu0 0
  %1043 = vmatpush1.bf16.msra.mxu0 %v1030
  %1044 = vmatprep.subr.bf16.mxu0 0
  %1045 = vmatpush1.bf16.msra.mxu0 %v1031
  %1046 = vmatprep.subr.bf16.mxu0 0
  %1047 = vmatpush1.bf16.msra.mxu0 %v1032
  %1048 = vmatprep.subr.bf16.mxu0 0
  %1049 = vmatpush1.bf16.msra.mxu0 %v1033
  %1050 = vmatprep.subr.bf16.mxu0 0
  %1051 = vmatpush1.bf16.msra.mxu0 0
  %1052 = vmatprep.subr.bf16.mxu0 0
  %1053 = vmatpush1.bf16.msra.mxu0 0
  %1054 = vmatprep.subr.bf16.mxu0 0
  %1055 = vmatpush1.bf16.msra.mxu0 0
  %1056 = vmatprep.subr.bf16.mxu0 0
  %1057 = vmatpush1.bf16.msra.mxu0 0
  %1058 = vmatprep.subr.bf16.mxu0 0
  %1059 = vmatpush1.bf16.msra.mxu0 0
  %1060 = vmatprep.subr.bf16.mxu0 0
  %1061 = vmatpush1.bf16.msra.mxu0 0
  %1062 = vmatprep.subr.bf16.mxu0 0
  %1063 = vmatpush1.bf16.msra.mxu0 0
  %1064 = vmatprep.subr.bf16.mxu0 0
  %1065 = vmatpush1.bf16.msra.mxu0 0
  %1066 = vmatprep.mubr.bf16.mxu0 0
  %1067 = vmatmul.mubr.bf16.gmra.mrb[0].mxu0 %v1018
  %v1068 = vpop.f32.mrb[0].mxu0
  %v1069 = vadd.f32 0.0, %v1068
  %v1070 = vpop.f32.mrb[0].mxu0
  %v1071 = vpop.f32.mrb[0].mxu0
  %v1072 = vadd.f32 0.0, %v1071
  %v1073 = vpop.f32.mrb[0].mxu0
  %1074 = vmatprep.mubr.bf16.mxu0 0
  %1075 = vmatmul.mubr.bf16.gmra.mrb[0].mxu0 %v1019
  %v1076 = vpop.f32.mrb[0].mxu0
  %v1077 = vadd.f32 0.0, %v1076
  %v1078 = vpop.f32.mrb[0].mxu0
  %v1079 = vpop.f32.mrb[0].mxu0
  %v1080 = vadd.f32 0.0, %v1079
  %v1081 = vpop.f32.mrb[0].mxu0
  %1082 = vmatprep.mubr.bf16.mxu0 0
  %1083 = vmatmul.mubr.bf16.gmra.mrb[0].mxu0 %v1020
  %v1084 = vpop.f32.mrb[0].mxu0
  %v1085 = vadd.f32 0.0, %v1084
  %v1086 = vpop.f32.mrb[0].mxu0
  %v1087 = vpop.f32.mrb[0].mxu0
  %v1088 = vadd.f32 0.0, %v1087
  %v1089 = vpop.f32.mrb[0].mxu0
  %1090 = vmatprep.mubr.bf16.mxu0 0
  %1091 = vmatmul.mubr.bf16.gmra.mrb[0].mxu0 %v1021
  %v1092 = vpop.f32.mrb[0].mxu0
  %v1093 = vadd.f32 0.0, %v1092
  %v1094 = vpop.f32.mrb[0].mxu0
  %v1095 = vpop.f32.mrb[0].mxu0
  %v1096 = vadd.f32 0.0, %v1095
  %v1097 = vpop.f32.mrb[0].mxu0
  %1098 = vmatprep.mubr.bf16.mxu0 0
  %1099 = vmatmul.mubr.bf16.gmra.mrb[0].mxu0 %v1022
  %v1100 = vpop.f32.mrb[0].mxu0
  %v1101 = vadd.f32 0.0, %v1100
  %v1102 = vpop.f32.mrb[0].mxu0
  %v1103 = vpop.f32.mrb[0].mxu0
  %v1104 = vadd.f32 0.0, %v1103
  %v1105 = vpop.f32.mrb[0].mxu0
  %1106 = vmatprep.mubr.bf16.mxu0 0
  %1107 = vmatmul.mubr.bf16.gmra.mrb[0].mxu0 %v1023
  %v1108 = vpop.f32.mrb[0].mxu0
  %v1109 = vadd.f32 0.0, %v1108
  %v1110 = vpop.f32.mrb[0].mxu0
  %v1111 = vpop.f32.mrb[0].mxu0
  %v1112 = vadd.f32 0.0, %v1111
  %v1113 = vpop.f32.mrb[0].mxu0
  %1114 = vmatprep.mubr.bf16.mxu0 0
  %1115 = vmatmul.mubr.bf16.gmra.mrb[0].mxu0 %v1024
  %v1116 = vpop.f32.mrb[0].mxu0
  %v1117 = vadd.f32 0.0, %v1116
  %v1118 = vpop.f32.mrb[0].mxu0
  %v1119 = vpop.f32.mrb[0].mxu0
  %v1120 = vadd.f32 0.0, %v1119
  %v1121 = vpop.f32.mrb[0].mxu0
  %1122 = vmatprep.mubr.bf16.mxu0 0
  %1123 = vmatmul.mubr.bf16.gmra.mrb[0].mxu0 %v1025
  %v1124 = vpop.f32.mrb[0].mxu0
  %v1125 = vadd.f32 0.0, %v1124
  %v1126 = vpop.f32.mrb[0].mxu0
  %v1127 = vpop.f32.mrb[0].mxu0
  %v1128 = vadd.f32 0.0, %v1127
  %v1129 = vpop.f32.mrb[0].mxu0
  %1130 = vdwg.mxu0
  %v1131 = vadd.f32 %v1002, %v1069
  %v1132 = vadd.f32 %v1003, %v1072
  %v1133 = vadd.f32 %v1004, %v1077
  %v1134 = vadd.f32 %v1005, %v1080
  %v1135 = vadd.f32 %v1006, %v1085
  %v1136 = vadd.f32 %v1007, %v1088
  %v1137 = vadd.f32 %v1008, %v1093
  %v1138 = vadd.f32 %v1009, %v1096
  %v1139 = vadd.f32 %v1010, %v1101
  %v1140 = vadd.f32 %v1011, %v1104
  %v1141 = vadd.f32 %v1012, %v1109
  %v1142 = vadd.f32 %v1013, %v1112
  %v1143 = vadd.f32 %v1014, %v1117
  %v1144 = vadd.f32 %v1015, %v1120
  %v1145 = vadd.f32 %v1016, %v1125
  %v1146 = vadd.f32 %v1017, %v1128
  %1147 = vst [vmem:[#allocation4] sm:$0xff] %v1131
  %1148 = vst [vmem:[#allocation4 + $0x8] sm:$0xff] %v1132
  %1149 = vst [vmem:[#allocation4 + $0x10] sm:$0xff] %v1133
  %1150 = vst [vmem:[#allocation4 + $0x18] sm:$0xff] %v1134
  %1151 = vst [vmem:[#allocation4 + $0x20] sm:$0xff] %v1135
  %1152 = vst [vmem:[#allocation4 + $0x28] sm:$0xff] %v1136
  %1153 = vst [vmem:[#allocation4 + $0x30] sm:$0xff] %v1137
  %1154 = vst [vmem:[#allocation4 + $0x38] sm:$0xff] %v1138
  %1155 = vst [vmem:[#allocation4 + $0x40] sm:$0xff] %v1139
  %1156 = vst [vmem:[#allocation4 + $0x48] sm:$0xff] %v1140
  %1157 = vst [vmem:[#allocation4 + $0x50] sm:$0xff] %v1141
  %1158 = vst [vmem:[#allocation4 + $0x58] sm:$0xff] %v1142
  %1159 = vst [vmem:[#allocation4 + $0x60] sm:$0xff] %v1143
  %1160 = vst [vmem:[#allocation4 + $0x68] sm:$0xff] %v1144
  %1161 = vst [vmem:[#allocation4 + $0x70] sm:$0xff] %v1145
  %1162 = vst [vmem:[#allocation4 + $0x78] sm:$0xff] %v1146
  %1163 = vst.msk [vmem:[#allocation2] sm:$0xff] %vm889, %v617
  %1164 = vst.msk [vmem:[#allocation2 + $0x8] sm:$0xff] %vm889, %v618
  %1165 = vst.msk [vmem:[#allocation2 + $0x10] sm:$0xff] %vm889, %v619
  %1166 = vst.msk [vmem:[#allocation2 + $0x18] sm:$0xff] %vm889, %v620
  %1167 = vst.msk [vmem:[#allocation2 + $0x20] sm:$0xff] %vm889, %v621
  %1168 = vst.msk [vmem:[#allocation2 + $0x28] sm:$0xff] %vm889, %v622
  %1169 = vst.msk [vmem:[#allocation2 + $0x30] sm:$0xff] %vm889, %v623
  %1170 = vst.msk [vmem:[#allocation2 + $0x38] sm:$0xff] %vm889, %v624
  %1171 = vst.msk [vmem:[#allocation2 + $0x40] sm:$0xff] %vm889, %v625
  %1172 = vst.msk [vmem:[#allocation2 + $0x48] sm:$0xff] %vm889, %v626
  %1173 = vst.msk [vmem:[#allocation2 + $0x50] sm:$0xff] %vm889, %v627
  %1174 = vst.msk [vmem:[#allocation2 + $0x58] sm:$0xff] %vm889, %v628
  %1175 = vst.msk [vmem:[#allocation2 + $0x60] sm:$0xff] %vm889, %v629
  %1176 = vst.msk [vmem:[#allocation2 + $0x68] sm:$0xff] %vm889, %v630
  %1177 = vst.msk [vmem:[#allocation2 + $0x70] sm:$0xff] %vm889, %v631
  %1178 = vst.msk [vmem:[#allocation2 + $0x78] sm:$0xff] %vm889, %v632
  // Predicated region
  $region22: #{agnn_dgl_forward.5} parent=0 // pred_check
    %p1179 = pneg %p21
  $region23: #{agnn_dgl_forward.5} parent=0 // pred_check_branch
    %1181 = sbr.rel (%p1179) target = $region25
  $region24: #{agnn_dgl_forward.5} parent=0 // pred_region
    %v1182 = vld [vmem:[#allocation2] sm:$0xff]
    %v1183 = vld [vmem:[#allocation2 + $0x8] sm:$0xff]
    %v1184 = vld [vmem:[#allocation2 + $0x10] sm:$0xff]
    %v1185 = vld [vmem:[#allocation2 + $0x18] sm:$0xff]
    %v1186 = vld [vmem:[#allocation2 + $0x20] sm:$0xff]
    %v1187 = vld [vmem:[#allocation2 + $0x28] sm:$0xff]
    %v1188 = vld [vmem:[#allocation2 + $0x30] sm:$0xff]
    %v1189 = vld [vmem:[#allocation2 + $0x38] sm:$0xff]
    %v1190 = vld [vmem:[#allocation2 + $0x40] sm:$0xff]
    %v1191 = vld [vmem:[#allocation2 + $0x48] sm:$0xff]
    %v1192 = vld [vmem:[#allocation2 + $0x50] sm:$0xff]
    %v1193 = vld [vmem:[#allocation2 + $0x58] sm:$0xff]
    %v1194 = vld [vmem:[#allocation2 + $0x60] sm:$0xff]
    %v1195 = vld [vmem:[#allocation2 + $0x68] sm:$0xff]
    %v1196 = vld [vmem:[#allocation2 + $0x70] sm:$0xff]
    %v1197 = vld [vmem:[#allocation2 + $0x78] sm:$0xff]
    %vm1198 = vcmp.gt.f32.partialorder %v1182, -5e+29
    %vm1199 = vcmp.gt.f32.partialorder %v1183, -5e+29
    %vm1200 = vcmp.gt.f32.partialorder %v1184, -5e+29
    %vm1201 = vcmp.gt.f32.partialorder %v1185, -5e+29
    %vm1202 = vcmp.gt.f32.partialorder %v1186, -5e+29
    %vm1203 = vcmp.gt.f32.partialorder %v1187, -5e+29
    %vm1204 = vcmp.gt.f32.partialorder %v1188, -5e+29
    %vm1205 = vcmp.gt.f32.partialorder %v1189, -5e+29
    %vm1206 = vcmp.gt.f32.partialorder %v1190, -5e+29
    %vm1207 = vcmp.gt.f32.partialorder %v1191, -5e+29
    %vm1208 = vcmp.gt.f32.partialorder %v1192, -5e+29
    %vm1209 = vcmp.gt.f32.partialorder %v1193, -5e+29
    %vm1210 = vcmp.gt.f32.partialorder %v1194, -5e+29
    %vm1211 = vcmp.gt.f32.partialorder %v1195, -5e+29
    %vm1212 = vcmp.gt.f32.partialorder %v1196, -5e+29
    %vm1213 = vcmp.gt.f32.partialorder %v1197, -5e+29
    %v1214 = vsel %vm1198, 1, 0
    %v1215 = vsel %vm1199, 1, 0
    %v1216 = vsel %vm1200, 1, 0
    %v1217 = vsel %vm1201, 1, 0
    %v1218 = vsel %vm1202, 1, 0
    %v1219 = vsel %vm1203, 1, 0
    %v1220 = vsel %vm1204, 1, 0
    %v1221 = vsel %vm1205, 1, 0
    %v1222 = vsel %vm1206, 1, 0
    %v1223 = vsel %vm1207, 1, 0
    %v1224 = vsel %vm1208, 1, 0
    %v1225 = vsel %vm1209, 1, 0
    %v1226 = vsel %vm1210, 1, 0
    %v1227 = vsel %vm1211, 1, 0
    %v1228 = vsel %vm1212, 1, 0
    %v1229 = vsel %vm1213, 1, 0
    %v1230 = vcvt.s32.f32 %v1214
    %v1231 = vcvt.s32.f32 %v1215
    %v1232 = vcvt.s32.f32 %v1216
    %v1233 = vcvt.s32.f32 %v1217
    %v1234 = vcvt.s32.f32 %v1218
    %v1235 = vcvt.s32.f32 %v1219
    %v1236 = vcvt.s32.f32 %v1220
    %v1237 = vcvt.s32.f32 %v1221
    %v1238 = vcvt.s32.f32 %v1222
    %v1239 = vcvt.s32.f32 %v1223
    %v1240 = vcvt.s32.f32 %v1224
    %v1241 = vcvt.s32.f32 %v1225
    %v1242 = vcvt.s32.f32 %v1226
    %v1243 = vcvt.s32.f32 %v1227
    %v1244 = vcvt.s32.f32 %v1228
    %v1245 = vcvt.s32.f32 %v1229
    %v1246 = vld [vmem:[#allocation3] sm:$0xff]
    %v1247 = vld [vmem:[#allocation3 + $0x8] sm:$0xff]
    %v1248 = vld [vmem:[#allocation3 + $0x10] sm:$0xff]
    %v1249 = vld [vmem:[#allocation3 + $0x18] sm:$0xff]
    %v1250 = vld [vmem:[#allocation3 + $0x20] sm:$0xff]
    %v1251 = vld [vmem:[#allocation3 + $0x28] sm:$0xff]
    %v1252 = vld [vmem:[#allocation3 + $0x30] sm:$0xff]
    %v1253 = vld [vmem:[#allocation3 + $0x38] sm:$0xff]
    %v1254 = vld [vmem:[#allocation3 + $0x40] sm:$0xff]
    %v1255 = vld [vmem:[#allocation3 + $0x48] sm:$0xff]
    %v1256 = vld [vmem:[#allocation3 + $0x50] sm:$0xff]
    %v1257 = vld [vmem:[#allocation3 + $0x58] sm:$0xff]
    %v1258 = vld [vmem:[#allocation3 + $0x60] sm:$0xff]
    %v1259 = vld [vmem:[#allocation3 + $0x68] sm:$0xff]
    %v1260 = vld [vmem:[#allocation3 + $0x70] sm:$0xff]
    %v1261 = vld [vmem:[#allocation3 + $0x78] sm:$0xff]
    %v1262 = vmax.f32 %v1246, 1e-30
    %v1263 = vmax.f32 %v1247, 1e-30
    %v1264 = vmax.f32 %v1248, 1e-30
    %v1265 = vmax.f32 %v1249, 1e-30
    %v1266 = vmax.f32 %v1250, 1e-30
    %v1267 = vmax.f32 %v1251, 1e-30
    %v1268 = vmax.f32 %v1252, 1e-30
    %v1269 = vmax.f32 %v1253, 1e-30
    %v1270 = vmax.f32 %v1254, 1e-30
    %v1271 = vmax.f32 %v1255, 1e-30
    %v1272 = vmax.f32 %v1256, 1e-30
    %v1273 = vmax.f32 %v1257, 1e-30
    %v1274 = vmax.f32 %v1258, 1e-30
    %v1275 = vmax.f32 %v1259, 1e-30
    %v1276 = vmax.f32 %v1260, 1e-30
    %v1277 = vmax.f32 %v1261, 1e-30
    %v1278 = vrcp.pop %v1262
    %v1279 = vrcp.pop %v1263
    %v1280 = vrcp.pop %v1264
    %v1281 = vrcp.pop %v1265
    %v1282 = vrcp.pop %v1266
    %v1283 = vrcp.pop %v1267
    %v1284 = vrcp.pop %v1268
    %v1285 = vrcp.pop %v1269
    %v1286 = vrcp.pop %v1270
    %v1287 = vrcp.pop %v1271
    %v1288 = vrcp.pop %v1272
    %v1289 = vrcp.pop %v1273
    %v1290 = vrcp.pop %v1274
    %v1291 = vrcp.pop %v1275
    %v1292 = vrcp.pop %v1276
    %v1293 = vrcp.pop %v1277
    %v1294 = vld [vmem:[#allocation4] sm:$0xff]
    %v1295 = vld [vmem:[#allocation4 + $0x8] sm:$0xff]
    %v1296 = vld [vmem:[#allocation4 + $0x10] sm:$0xff]
    %v1297 = vld [vmem:[#allocation4 + $0x18] sm:$0xff]
    %v1298 = vld [vmem:[#allocation4 + $0x20] sm:$0xff]
    %v1299 = vld [vmem:[#allocation4 + $0x28] sm:$0xff]
    %v1300 = vld [vmem:[#allocation4 + $0x30] sm:$0xff]
    %v1301 = vld [vmem:[#allocation4 + $0x38] sm:$0xff]
    %v1302 = vld [vmem:[#allocation4 + $0x40] sm:$0xff]
    %v1303 = vld [vmem:[#allocation4 + $0x48] sm:$0xff]
    %v1304 = vld [vmem:[#allocation4 + $0x50] sm:$0xff]
    %v1305 = vld [vmem:[#allocation4 + $0x58] sm:$0xff]
    %v1306 = vld [vmem:[#allocation4 + $0x60] sm:$0xff]
    %v1307 = vld [vmem:[#allocation4 + $0x68] sm:$0xff]
    %v1308 = vld [vmem:[#allocation4 + $0x70] sm:$0xff]
    %v1309 = vld [vmem:[#allocation4 + $0x78] sm:$0xff]
    %1311 = vset.pattern.permute.xlu0 0
    %1312 = vperm.xlu0 %1311, %v1278
    %v1313 = vpop.permute.xlu0 %1312
    %1316 = vset.pattern.permute.xlu0 0
    %1317 = vperm.xlu0 %1316, %v1279
    %v1318 = vpop.permute.xlu0 %1317
    %1321 = vset.pattern.permute.xlu0 0
    %1322 = vperm.xlu0 %1321, %v1280
    %v1323 = vpop.permute.xlu0 %1322
    %1326 = vset.pattern.permute.xlu0 0
    %1327 = vperm.xlu0 %1326, %v1281
    %v1328 = vpop.permute.xlu0 %1327
    %1331 = vset.pattern.permute.xlu0 0
    %1332 = vperm.xlu0 %1331, %v1282
    %v1333 = vpop.permute.xlu0 %1332
    %1336 = vset.pattern.permute.xlu0 0
    %1337 = vperm.xlu0 %1336, %v1283
    %v1338 = vpop.permute.xlu0 %1337
    %1341 = vset.pattern.permute.xlu0 0
    %1342 = vperm.xlu0 %1341, %v1284
    %v1343 = vpop.permute.xlu0 %1342
    %1346 = vset.pattern.permute.xlu0 0
    %1347 = vperm.xlu0 %1346, %v1285
    %v1348 = vpop.permute.xlu0 %1347
    %1351 = vset.pattern.permute.xlu0 0
    %1352 = vperm.xlu0 %1351, %v1286
    %v1353 = vpop.permute.xlu0 %1352
    %1356 = vset.pattern.permute.xlu0 0
    %1357 = vperm.xlu0 %1356, %v1287
    %v1358 = vpop.permute.xlu0 %1357
    %1361 = vset.pattern.permute.xlu0 0
    %1362 = vperm.xlu0 %1361, %v1288
    %v1363 = vpop.permute.xlu0 %1362
    %1366 = vset.pattern.permute.xlu0 0
    %1367 = vperm.xlu0 %1366, %v1289
    %v1368 = vpop.permute.xlu0 %1367
    %1371 = vset.pattern.permute.xlu0 0
    %1372 = vperm.xlu0 %1371, %v1290
    %v1373 = vpop.permute.xlu0 %1372
    %1376 = vset.pattern.permute.xlu0 0
    %1377 = vperm.xlu0 %1376, %v1291
    %v1378 = vpop.permute.xlu0 %1377
    %1381 = vset.pattern.permute.xlu0 0
    %1382 = vperm.xlu0 %1381, %v1292
    %v1383 = vpop.permute.xlu0 %1382
    %1386 = vset.pattern.permute.xlu0 0
    %1387 = vperm.xlu0 %1386, %v1293
    %v1388 = vpop.permute.xlu0 %1387
    %v1390 = vmul.f32 %v1294, %v1313
    %v1391 = vmul.f32 %v1295, %v1318
    %v1392 = vmul.f32 %v1296, %v1323
    %v1393 = vmul.f32 %v1297, %v1328
    %v1394 = vmul.f32 %v1298, %v1333
    %v1395 = vmul.f32 %v1299, %v1338
    %v1396 = vmul.f32 %v1300, %v1343
    %v1397 = vmul.f32 %v1301, %v1348
    %v1398 = vmul.f32 %v1302, %v1353
    %v1399 = vmul.f32 %v1303, %v1358
    %v1400 = vmul.f32 %v1304, %v1363
    %v1401 = vmul.f32 %v1305, %v1368
    %v1402 = vmul.f32 %v1306, %v1373
    %v1403 = vmul.f32 %v1307, %v1378
    %v1404 = vmul.f32 %v1308, %v1383
    %v1405 = vmul.f32 %v1309, %v1388
    %1407 = vset.pattern.permute.xlu0 0
    %1408 = vperm.xlu0 %1407, %v1230
    %v1409 = vpop.permute.xlu0 %1408
    %1412 = vset.pattern.permute.xlu0 0
    %1413 = vperm.xlu0 %1412, %v1231
    %v1414 = vpop.permute.xlu0 %1413
    %1417 = vset.pattern.permute.xlu0 0
    %1418 = vperm.xlu0 %1417, %v1232
    %v1419 = vpop.permute.xlu0 %1418
    %1422 = vset.pattern.permute.xlu0 0
    %1423 = vperm.xlu0 %1422, %v1233
    %v1424 = vpop.permute.xlu0 %1423
    %1427 = vset.pattern.permute.xlu0 0
    %1428 = vperm.xlu0 %1427, %v1234
    %v1429 = vpop.permute.xlu0 %1428
    %1432 = vset.pattern.permute.xlu0 0
    %1433 = vperm.xlu0 %1432, %v1235
    %v1434 = vpop.permute.xlu0 %1433
    %1437 = vset.pattern.permute.xlu0 0
    %1438 = vperm.xlu0 %1437, %v1236
    %v1439 = vpop.permute.xlu0 %1438
    %1442 = vset.pattern.permute.xlu0 0
    %1443 = vperm.xlu0 %1442, %v1237
    %v1444 = vpop.permute.xlu0 %1443
    %1447 = vset.pattern.permute.xlu0 0
    %1448 = vperm.xlu0 %1447, %v1238
    %v1449 = vpop.permute.xlu0 %1448
    %1452 = vset.pattern.permute.xlu0 0
    %1453 = vperm.xlu0 %1452, %v1239
    %v1454 = vpop.permute.xlu0 %1453
    %1457 = vset.pattern.permute.xlu0 0
    %1458 = vperm.xlu0 %1457, %v1240
    %v1459 = vpop.permute.xlu0 %1458
    %1462 = vset.pattern.permute.xlu0 0
    %1463 = vperm.xlu0 %1462, %v1241
    %v1464 = vpop.permute.xlu0 %1463
    %1467 = vset.pattern.permute.xlu0 0
    %1468 = vperm.xlu0 %1467, %v1242
    %v1469 = vpop.permute.xlu0 %1468
    %1472 = vset.pattern.permute.xlu0 0
    %1473 = vperm.xlu0 %1472, %v1243
    %v1474 = vpop.permute.xlu0 %1473
    %1477 = vset.pattern.permute.xlu0 0
    %1478 = vperm.xlu0 %1477, %v1244
    %v1479 = vpop.permute.xlu0 %1478
    %1482 = vset.pattern.permute.xlu0 0
    %1483 = vperm.xlu0 %1482, %v1245
    %v1484 = vpop.permute.xlu0 %1483
    %v1486 = vmul.f32 %v1390, %v1409
    %v1487 = vmul.f32 %v1391, %v1414
    %v1488 = vmul.f32 %v1392, %v1419
    %v1489 = vmul.f32 %v1393, %v1424
    %v1490 = vmul.f32 %v1394, %v1429
    %v1491 = vmul.f32 %v1395, %v1434
    %v1492 = vmul.f32 %v1396, %v1439
    %v1493 = vmul.f32 %v1397, %v1444
    %v1494 = vmul.f32 %v1398, %v1449
    %v1495 = vmul.f32 %v1399, %v1454
    %v1496 = vmul.f32 %v1400, %v1459
    %v1497 = vmul.f32 %v1401, %v1464
    %v1498 = vmul.f32 %v1402, %v1469
    %v1499 = vmul.f32 %v1403, %v1474
    %v1500 = vmul.f32 %v1404, %v1479
    %v1501 = vmul.f32 %v1405, %v1484
    %1502 = vst [vmem:[%s4] sm:$0xff] %v1486
    %1503 = vst [vmem:[%s4 + $0x8] sm:$0xff] %v1487
    %1504 = vst [vmem:[%s4 + $0x10] sm:$0xff] %v1488
    %1505 = vst [vmem:[%s4 + $0x18] sm:$0xff] %v1489
    %1506 = vst [vmem:[%s4 + $0x20] sm:$0xff] %v1490
    %1507 = vst [vmem:[%s4 + $0x28] sm:$0xff] %v1491
    %1508 = vst [vmem:[%s4 + $0x30] sm:$0xff] %v1492
    %1509 = vst [vmem:[%s4 + $0x38] sm:$0xff] %v1493
    %1510 = vst [vmem:[%s4 + $0x40] sm:$0xff] %v1494
    %1511 = vst [vmem:[%s4 + $0x48] sm:$0xff] %v1495
    %1512 = vst [vmem:[%s4 + $0x50] sm:$0xff] %v1496
    %1513 = vst [vmem:[%s4 + $0x58] sm:$0xff] %v1497
    %1514 = vst [vmem:[%s4 + $0x60] sm:$0xff] %v1498
    %1515 = vst [vmem:[%s4 + $0x68] sm:$0xff] %v1499
    %1516 = vst [vmem:[%s4 + $0x70] sm:$0xff] %v1500
    %1517 = vst [vmem:[%s4 + $0x78] sm:$0xff] %v1501
  $region25: #{agnn_dgl_forward.5} parent=0 // pred_fallthru
    _
  // Predicated region
  $region26: #{agnn_dgl_forward.5} parent=0 // pred_check
    _
  $region27: #{agnn_dgl_forward.5} parent=0 // pred_check_branch
    %1519 = sbr.rel (0) target = $region29
  $region28: #{agnn_dgl_forward.5} parent=0 // pred_region
    _
  $region29: #{agnn_dgl_forward.5} parent=0 // pred_fallthru
    _
  // Predicated region
  $region30: #{agnn_dgl_forward.5} parent=0 // pred_check
    _
  $region31: #{agnn_dgl_forward.5} parent=0 // pred_check_branch
    %1521 = sbr.rel (0) target = $region33
  $region32: #{agnn_dgl_forward.5} parent=0 // pred_region
    _
  $region33: #{agnn_dgl_forward.5} parent=0 // pred_fallthru
    _

</llo_original>
